<compile_context>
chip_gen: v7x
topology: tpu7x:2x2x1
jax: 0.10.0
libtpu: 0.0.40
codegen_flags: <defaults>
</compile_context>

<pallas_src>
import functools

import jax
import jax.numpy as jnp
from jax.experimental import pallas as pl
from jax.experimental.pallas import tpu as pltpu

LN_EPS = 1e-5


def _rot_compress_kernel(x_ref, w1_ref, b1_ref, w2_ref, b2_ref, g_ref, bt_ref,
                         o_ref, *, na):
    # x_ref: (na, tn, C) tile of the raw 'banc' input (B squeezed).
    # w1_ref: (na, C, 2C); w2_ref: (2C, C); biases/LN params: (1, 2C)/(1, C).
    x = x_ref[...]                                           # native dtype

    # --- max over the anchor axis (VPU elementwise reduction) ---
    xmax = jnp.max(x, axis=0).astype(jnp.float32)            # (tn, C)

    # --- expand Linear(A*C -> 2C): per-anchor K=C matmuls accumulated in f32.
    #     Feature order of 'b n (a c)' == anchor-major, matching w1[j] slabs. ---
    acc = jnp.dot(x[0], w1_ref[0], preferred_element_type=jnp.float32)
    for j in range(1, na):                                   # static unrolled loop
        acc = acc + jnp.dot(x[j], w1_ref[j],
                            preferred_element_type=jnp.float32)
    h = jnp.maximum(acc + b1_ref[...].astype(jnp.float32), 0.0)   # ReLU, (tn, 2C)

    # --- squeeze Linear(2C -> C) ---
    y = jnp.dot(h, w2_ref[...], preferred_element_type=jnp.float32)
    y = y + b2_ref[...].astype(jnp.float32)                  # (tn, C)

    # --- residual add + LayerNorm over C (f32) ---
    z = xmax + y
    mu = jnp.mean(z, axis=-1, keepdims=True)
    var = jnp.mean(jnp.square(z - mu), axis=-1, keepdims=True)
    zn = (z - mu) * jax.lax.rsqrt(var + LN_EPS)
    o_ref[...] = (zn * g_ref[...].astype(jnp.float32)
                  + bt_ref[...].astype(jnp.float32)).astype(o_ref.dtype)


def rot_compress_output(x_banc, w1, b1, w2, b2, gamma, beta, *, tn=512):
    """x_banc: (B, A, N, C). Params: w1 (A, C, 2C), b1 (1, 2C), w2 (2C, C),
    b2 (1, C), gamma (1, C), beta (1, C). Returns (B, N, C)."""
    b, a, n, c = x_banc.shape
    two_c = 2 * c

    # Row tile along N: as large as possible (<=512), multiple of 8 unless it
    # spans all of N (then the full-dim exemption applies).
    tn = min(tn, n)
    if tn != n:
        tn = max(8, (tn // 8) * 8)
    grid = (b, pl.cdiv(n, tn))

    kernel = functools.partial(_rot_compress_kernel, na=a)

    out = pl.pallas_call(
        kernel,
        out_shape=jax.ShapeDtypeStruct((b, n, c), x_banc.dtype),
        grid_spec=pltpu.PrefetchScalarGridSpec(
            num_scalar_prefetch=0,
            grid=grid,
            in_specs=[
                # raw 'banc' input, B squeezed -> kernel sees (a, tn, c)
                pl.BlockSpec((None, a, tn, c), lambda bi, ni: (bi, 0, ni, 0)),
                pl.BlockSpec((a, c, two_c), lambda bi, ni: (0, 0, 0)),   # W1
                pl.BlockSpec((1, two_c), lambda bi, ni: (0, 0)),         # b1
                pl.BlockSpec((two_c, c), lambda bi, ni: (0, 0)),         # W2
                pl.BlockSpec((1, c), lambda bi, ni: (0, 0)),             # b2
                pl.BlockSpec((1, c), lambda bi, ni: (0, 0)),             # gamma
                pl.BlockSpec((1, c), lambda bi, ni: (0, 0)),             # beta
            ],
            out_specs=pl.BlockSpec((None, tn, c), lambda bi, ni: (bi, ni, 0)),
        ),
        compiler_params=pltpu.CompilerParams(
            dimension_semantics=("parallel", "parallel")),
    )(x_banc, w1, b1, w2, b2, gamma, beta)
    return out


def reference(x_banc, w1, b1, w2, b2, gamma, beta):
    b, a, n, c = x_banc.shape
    xmax = jnp.max(x_banc, axis=1)                                   # (B, N, C)
    xf = jnp.transpose(x_banc, (0, 2, 1, 3)).reshape(b, n, a * c)
    h = jnp.maximum(xf @ w1.reshape(a * c, 2 * c) + b1.reshape(-1), 0.0)
    y = h @ w2 + b2.reshape(-1)
    z = xmax + y
    mu = z.mean(-1, keepdims=True)
    var = ((z - mu) ** 2).mean(-1, keepdims=True)
    return (z - mu) / jnp.sqrt(var + LN_EPS) * gamma.reshape(-1) + beta.reshape(-1)


if __name__ == "__main__":
    # Small shapes consistent with the module: d_model=32, na=12, batch=2, n=16.
    B, NA, N, C = 2, 12, 16, 32
    key = jax.random.PRNGKey(0)
    kx, kw1, kb1, kw2, kb2 = jax.random.split(key, 5)

    x = jax.random.normal(kx, (B, NA, N, C), jnp.float32)

    # Deterministic synthetic parameters (module __init__ shapes; no checkpoint).
    w1 = jax.random.normal(kw1, (NA, C, 2 * C), jnp.float32) * (1.0 / (NA * C) ** 0.5)
    b1 = jax.random.normal(kb1, (1, 2 * C), jnp.float32) * 0.02
    w2 = jax.random.normal(kw2, (2 * C, C), jnp.float32) * (1.0 / (2 * C) ** 0.5)
    b2 = jax.random.normal(kb2, (1, C), jnp.float32) * 0.02
    gamma = jnp.ones((1, C), jnp.float32)
    beta = jnp.zeros((1, C), jnp.float32)

    out = rot_compress_output(x, w1, b1, w2, b2, gamma, beta)
    out = jax.block_until_ready(out)

    ref = reference(x, w1, b1, w2, b2, gamma, beta)
    assert out.shape == (B, N, C)
    assert jnp.allclose(out, ref, atol=1e-4, rtol=1e-4), \
        f"max abs err {jnp.max(jnp.abs(out - ref))}"
    print("KERNEL_OK")
</pallas_src>

<mosaic_0001>
module attributes {stable_mosaic.version = 11 : i64} {
  func.func @_rot_compress_kernel(%arg0: i32, %arg1: i32, %arg2: memref<1x12x16x32xf32, #tpu.memory_space<vmem>>, %arg3: memref<12x32x64xf32, #tpu.memory_space<vmem>>, %arg4: memref<1x64xf32, #tpu.memory_space<vmem>>, %arg5: memref<64x32xf32, #tpu.memory_space<vmem>>, %arg6: memref<1x32xf32, #tpu.memory_space<vmem>>, %arg7: memref<1x32xf32, #tpu.memory_space<vmem>>, %arg8: memref<1x32xf32, #tpu.memory_space<vmem>>, %arg9: memref<1x16x32xf32, #tpu.memory_space<vmem>>) attributes {dimension_semantics = [#tpu.dimension_semantics<parallel>, #tpu.dimension_semantics<parallel>], iteration_bounds = array<i64: 2, 1>, scalar_prefetch = 0 : i64, scratch_operands = 0 : i64, tpu.core_type = #tpu.core_type<tc>, window_params = [{transform_indices = @transform_0, window_bounds = array<i64: 1, 12, 16, 32>}, {pipeline_mode = #tpu.pipeline_mode<synchronous>, transform_indices = @transform_1, window_bounds = array<i64: 12, 32, 64>}, {pipeline_mode = #tpu.pipeline_mode<synchronous>, transform_indices = @transform_2, window_bounds = array<i64: 1, 64>}, {pipeline_mode = #tpu.pipeline_mode<synchronous>, transform_indices = @transform_3, window_bounds = array<i64: 64, 32>}, {pipeline_mode = #tpu.pipeline_mode<synchronous>, transform_indices = @transform_4, window_bounds = array<i64: 1, 32>}, {pipeline_mode = #tpu.pipeline_mode<synchronous>, transform_indices = @transform_5, window_bounds = array<i64: 1, 32>}, {pipeline_mode = #tpu.pipeline_mode<synchronous>, transform_indices = @transform_6, window_bounds = array<i64: 1, 32>}, {transform_indices = @transform_7, window_bounds = array<i64: 1, 16, 32>}]} {
    %c0 = arith.constant 0 : index
    %c0_0 = arith.constant 0 : index
    %c0_1 = arith.constant 0 : index
    %c0_2 = arith.constant 0 : index
    %0 = vector.load %arg2[%c0, %c0_0, %c0_1, %c0_2] : memref<1x12x16x32xf32, #tpu.memory_space<vmem>>, vector<1x12x16x32xf32>
    %1 = vector.shape_cast %0 : vector<1x12x16x32xf32> to vector<12x16x32xf32>
    %cst = arith.constant dense<0xFF800000> : vector<16x32xf32>
    %2 = vector.multi_reduction <maximumf>, %1, %cst [0] : vector<12x16x32xf32> to vector<16x32xf32>
    %3 = vector.extract_strided_slice %1 {offsets = [0, 0, 0], sizes = [1, 16, 32], strides = [1, 1, 1]} : vector<12x16x32xf32> to vector<1x16x32xf32>
    %4 = vector.shape_cast %3 : vector<1x16x32xf32> to vector<16x32xf32>
    %c0_3 = arith.constant 0 : index
    %c0_4 = arith.constant 0 : index
    %c0_5 = arith.constant 0 : index
    %5 = vector.load %arg3[%c0_3, %c0_4, %c0_5] : memref<12x32x64xf32, #tpu.memory_space<vmem>>, vector<1x32x64xf32>
    %6 = vector.shape_cast %5 : vector<1x32x64xf32> to vector<32x64xf32>
    %cst_6 = arith.constant dense<0.000000e+00> : vector<16x64xf32>
    %7 = tpu.matmul %4, %6, %cst_6 {dimension_numbers = #tpu.dot_dimension_numbers<[1], [0], [0], [1], [0, 0, 1, 1], [], []>} : vector<16x32xf32>, vector<32x64xf32>, vector<16x64xf32> -> vector<16x64xf32>
    %8 = vector.extract_strided_slice %1 {offsets = [1, 0, 0], sizes = [1, 16, 32], strides = [1, 1, 1]} : vector<12x16x32xf32> to vector<1x16x32xf32>
    %9 = vector.shape_cast %8 : vector<1x16x32xf32> to vector<16x32xf32>
    %c1 = arith.constant 1 : index
    %c0_7 = arith.constant 0 : index
    %c0_8 = arith.constant 0 : index
    %10 = vector.load %arg3[%c1, %c0_7, %c0_8] : memref<12x32x64xf32, #tpu.memory_space<vmem>>, vector<1x32x64xf32>
    %11 = vector.shape_cast %10 : vector<1x32x64xf32> to vector<32x64xf32>
    %cst_9 = arith.constant dense<0.000000e+00> : vector<16x64xf32>
    %12 = tpu.matmul %9, %11, %cst_9 {dimension_numbers = #tpu.dot_dimension_numbers<[1], [0], [0], [1], [0, 0, 1, 1], [], []>} : vector<16x32xf32>, vector<32x64xf32>, vector<16x64xf32> -> vector<16x64xf32>
    %13 = arith.addf %7, %12 : vector<16x64xf32>
    %14 = vector.extract_strided_slice %1 {offsets = [2, 0, 0], sizes = [1, 16, 32], strides = [1, 1, 1]} : vector<12x16x32xf32> to vector<1x16x32xf32>
    %15 = vector.shape_cast %14 : vector<1x16x32xf32> to vector<16x32xf32>
    %c2 = arith.constant 2 : index
    %c0_10 = arith.constant 0 : index
    %c0_11 = arith.constant 0 : index
    %16 = vector.load %arg3[%c2, %c0_10, %c0_11] : memref<12x32x64xf32, #tpu.memory_space<vmem>>, vector<1x32x64xf32>
    %17 = vector.shape_cast %16 : vector<1x32x64xf32> to vector<32x64xf32>
    %cst_12 = arith.constant dense<0.000000e+00> : vector<16x64xf32>
    %18 = tpu.matmul %15, %17, %cst_12 {dimension_numbers = #tpu.dot_dimension_numbers<[1], [0], [0], [1], [0, 0, 1, 1], [], []>} : vector<16x32xf32>, vector<32x64xf32>, vector<16x64xf32> -> vector<16x64xf32>
    %19 = arith.addf %13, %18 : vector<16x64xf32>
    %20 = vector.extract_strided_slice %1 {offsets = [3, 0, 0], sizes = [1, 16, 32], strides = [1, 1, 1]} : vector<12x16x32xf32> to vector<1x16x32xf32>
    %21 = vector.shape_cast %20 : vector<1x16x32xf32> to vector<16x32xf32>
    %c3 = arith.constant 3 : index
    %c0_13 = arith.constant 0 : index
    %c0_14 = arith.constant 0 : index
    %22 = vector.load %arg3[%c3, %c0_13, %c0_14] : memref<12x32x64xf32, #tpu.memory_space<vmem>>, vector<1x32x64xf32>
    %23 = vector.shape_cast %22 : vector<1x32x64xf32> to vector<32x64xf32>
    %cst_15 = arith.constant dense<0.000000e+00> : vector<16x64xf32>
    %24 = tpu.matmul %21, %23, %cst_15 {dimension_numbers = #tpu.dot_dimension_numbers<[1], [0], [0], [1], [0, 0, 1, 1], [], []>} : vector<16x32xf32>, vector<32x64xf32>, vector<16x64xf32> -> vector<16x64xf32>
    %25 = arith.addf %19, %24 : vector<16x64xf32>
    %26 = vector.extract_strided_slice %1 {offsets = [4, 0, 0], sizes = [1, 16, 32], strides = [1, 1, 1]} : vector<12x16x32xf32> to vector<1x16x32xf32>
    %27 = vector.shape_cast %26 : vector<1x16x32xf32> to vector<16x32xf32>
    %c4 = arith.constant 4 : index
    %c0_16 = arith.constant 0 : index
    %c0_17 = arith.constant 0 : index
    %28 = vector.load %arg3[%c4, %c0_16, %c0_17] : memref<12x32x64xf32, #tpu.memory_space<vmem>>, vector<1x32x64xf32>
    %29 = vector.shape_cast %28 : vector<1x32x64xf32> to vector<32x64xf32>
    %cst_18 = arith.constant dense<0.000000e+00> : vector<16x64xf32>
    %30 = tpu.matmul %27, %29, %cst_18 {dimension_numbers = #tpu.dot_dimension_numbers<[1], [0], [0], [1], [0, 0, 1, 1], [], []>} : vector<16x32xf32>, vector<32x64xf32>, vector<16x64xf32> -> vector<16x64xf32>
    %31 = arith.addf %25, %30 : vector<16x64xf32>
    %32 = vector.extract_strided_slice %1 {offsets = [5, 0, 0], sizes = [1, 16, 32], strides = [1, 1, 1]} : vector<12x16x32xf32> to vector<1x16x32xf32>
    %33 = vector.shape_cast %32 : vector<1x16x32xf32> to vector<16x32xf32>
    %c5 = arith.constant 5 : index
    %c0_19 = arith.constant 0 : index
    %c0_20 = arith.constant 0 : index
    %34 = vector.load %arg3[%c5, %c0_19, %c0_20] : memref<12x32x64xf32, #tpu.memory_space<vmem>>, vector<1x32x64xf32>
    %35 = vector.shape_cast %34 : vector<1x32x64xf32> to vector<32x64xf32>
    %cst_21 = arith.constant dense<0.000000e+00> : vector<16x64xf32>
    %36 = tpu.matmul %33, %35, %cst_21 {dimension_numbers = #tpu.dot_dimension_numbers<[1], [0], [0], [1], [0, 0, 1, 1], [], []>} : vector<16x32xf32>, vector<32x64xf32>, vector<16x64xf32> -> vector<16x64xf32>
    %37 = arith.addf %31, %36 : vector<16x64xf32>
    %38 = vector.extract_strided_slice %1 {offsets = [6, 0, 0], sizes = [1, 16, 32], strides = [1, 1, 1]} : vector<12x16x32xf32> to vector<1x16x32xf32>
    %39 = vector.shape_cast %38 : vector<1x16x32xf32> to vector<16x32xf32>
    %c6 = arith.constant 6 : index
    %c0_22 = arith.constant 0 : index
    %c0_23 = arith.constant 0 : index
    %40 = vector.load %arg3[%c6, %c0_22, %c0_23] : memref<12x32x64xf32, #tpu.memory_space<vmem>>, vector<1x32x64xf32>
    %41 = vector.shape_cast %40 : vector<1x32x64xf32> to vector<32x64xf32>
    %cst_24 = arith.constant dense<0.000000e+00> : vector<16x64xf32>
    %42 = tpu.matmul %39, %41, %cst_24 {dimension_numbers = #tpu.dot_dimension_numbers<[1], [0], [0], [1], [0, 0, 1, 1], [], []>} : vector<16x32xf32>, vector<32x64xf32>, vector<16x64xf32> -> vector<16x64xf32>
    %43 = arith.addf %37, %42 : vector<16x64xf32>
    %44 = vector.extract_strided_slice %1 {offsets = [7, 0, 0], sizes = [1, 16, 32], strides = [1, 1, 1]} : vector<12x16x32xf32> to vector<1x16x32xf32>
    %45 = vector.shape_cast %44 : vector<1x16x32xf32> to vector<16x32xf32>
    %c7 = arith.constant 7 : index
    %c0_25 = arith.constant 0 : index
    %c0_26 = arith.constant 0 : index
    %46 = vector.load %arg3[%c7, %c0_25, %c0_26] : memref<12x32x64xf32, #tpu.memory_space<vmem>>, vector<1x32x64xf32>
    %47 = vector.shape_cast %46 : vector<1x32x64xf32> to vector<32x64xf32>
    %cst_27 = arith.constant dense<0.000000e+00> : vector<16x64xf32>
    %48 = tpu.matmul %45, %47, %cst_27 {dimension_numbers = #tpu.dot_dimension_numbers<[1], [0], [0], [1], [0, 0, 1, 1], [], []>} : vector<16x32xf32>, vector<32x64xf32>, vector<16x64xf32> -> vector<16x64xf32>
    %49 = arith.addf %43, %48 : vector<16x64xf32>
    %50 = vector.extract_strided_slice %1 {offsets = [8, 0, 0], sizes = [1, 16, 32], strides = [1, 1, 1]} : vector<12x16x32xf32> to vector<1x16x32xf32>
    %51 = vector.shape_cast %50 : vector<1x16x32xf32> to vector<16x32xf32>
    %c8 = arith.constant 8 : index
    %c0_28 = arith.constant 0 : index
    %c0_29 = arith.constant 0 : index
    %52 = vector.load %arg3[%c8, %c0_28, %c0_29] : memref<12x32x64xf32, #tpu.memory_space<vmem>>, vector<1x32x64xf32>
    %53 = vector.shape_cast %52 : vector<1x32x64xf32> to vector<32x64xf32>
    %cst_30 = arith.constant dense<0.000000e+00> : vector<16x64xf32>
    %54 = tpu.matmul %51, %53, %cst_30 {dimension_numbers = #tpu.dot_dimension_numbers<[1], [0], [0], [1], [0, 0, 1, 1], [], []>} : vector<16x32xf32>, vector<32x64xf32>, vector<16x64xf32> -> vector<16x64xf32>
    %55 = arith.addf %49, %54 : vector<16x64xf32>
    %56 = vector.extract_strided_slice %1 {offsets = [9, 0, 0], sizes = [1, 16, 32], strides = [1, 1, 1]} : vector<12x16x32xf32> to vector<1x16x32xf32>
    %57 = vector.shape_cast %56 : vector<1x16x32xf32> to vector<16x32xf32>
    %c9 = arith.constant 9 : index
    %c0_31 = arith.constant 0 : index
    %c0_32 = arith.constant 0 : index
    %58 = vector.load %arg3[%c9, %c0_31, %c0_32] : memref<12x32x64xf32, #tpu.memory_space<vmem>>, vector<1x32x64xf32>
    %59 = vector.shape_cast %58 : vector<1x32x64xf32> to vector<32x64xf32>
    %cst_33 = arith.constant dense<0.000000e+00> : vector<16x64xf32>
    %60 = tpu.matmul %57, %59, %cst_33 {dimension_numbers = #tpu.dot_dimension_numbers<[1], [0], [0], [1], [0, 0, 1, 1], [], []>} : vector<16x32xf32>, vector<32x64xf32>, vector<16x64xf32> -> vector<16x64xf32>
    %61 = arith.addf %55, %60 : vector<16x64xf32>
    %62 = vector.extract_strided_slice %1 {offsets = [10, 0, 0], sizes = [1, 16, 32], strides = [1, 1, 1]} : vector<12x16x32xf32> to vector<1x16x32xf32>
    %63 = vector.shape_cast %62 : vector<1x16x32xf32> to vector<16x32xf32>
    %c10 = arith.constant 10 : index
    %c0_34 = arith.constant 0 : index
    %c0_35 = arith.constant 0 : index
    %64 = vector.load %arg3[%c10, %c0_34, %c0_35] : memref<12x32x64xf32, #tpu.memory_space<vmem>>, vector<1x32x64xf32>
    %65 = vector.shape_cast %64 : vector<1x32x64xf32> to vector<32x64xf32>
    %cst_36 = arith.constant dense<0.000000e+00> : vector<16x64xf32>
    %66 = tpu.matmul %63, %65, %cst_36 {dimension_numbers = #tpu.dot_dimension_numbers<[1], [0], [0], [1], [0, 0, 1, 1], [], []>} : vector<16x32xf32>, vector<32x64xf32>, vector<16x64xf32> -> vector<16x64xf32>
    %67 = arith.addf %61, %66 : vector<16x64xf32>
    %68 = vector.extract_strided_slice %1 {offsets = [11, 0, 0], sizes = [1, 16, 32], strides = [1, 1, 1]} : vector<12x16x32xf32> to vector<1x16x32xf32>
    %69 = vector.shape_cast %68 : vector<1x16x32xf32> to vector<16x32xf32>
    %c11 = arith.constant 11 : index
    %c0_37 = arith.constant 0 : index
    %c0_38 = arith.constant 0 : index
    %70 = vector.load %arg3[%c11, %c0_37, %c0_38] : memref<12x32x64xf32, #tpu.memory_space<vmem>>, vector<1x32x64xf32>
    %71 = vector.shape_cast %70 : vector<1x32x64xf32> to vector<32x64xf32>
    %cst_39 = arith.constant dense<0.000000e+00> : vector<16x64xf32>
    %72 = tpu.matmul %69, %71, %cst_39 {dimension_numbers = #tpu.dot_dimension_numbers<[1], [0], [0], [1], [0, 0, 1, 1], [], []>} : vector<16x32xf32>, vector<32x64xf32>, vector<16x64xf32> -> vector<16x64xf32>
    %73 = arith.addf %67, %72 : vector<16x64xf32>
    %c0_40 = arith.constant 0 : index
    %c0_41 = arith.constant 0 : index
    %74 = vector.load %arg4[%c0_40, %c0_41] : memref<1x64xf32, #tpu.memory_space<vmem>>, vector<1x64xf32>
    %75 = vector.broadcast %74 : vector<1x64xf32> to vector<16x64xf32>
    %76 = arith.addf %73, %75 : vector<16x64xf32>
    %cst_42 = arith.constant 0.000000e+00 : f32
    %77 = vector.broadcast %cst_42 : f32 to vector<16x64xf32>
    %78 = arith.maximumf %76, %77 : vector<16x64xf32>
    %c0_43 = arith.constant 0 : index
    %c0_44 = arith.constant 0 : index
    %79 = vector.load %arg5[%c0_43, %c0_44] : memref<64x32xf32, #tpu.memory_space<vmem>>, vector<64x32xf32>
    %cst_45 = arith.constant dense<0.000000e+00> : vector<16x32xf32>
    %80 = tpu.matmul %78, %79, %cst_45 {dimension_numbers = #tpu.dot_dimension_numbers<[1], [0], [0], [1], [0, 0, 1, 1], [], []>} : vector<16x64xf32>, vector<64x32xf32>, vector<16x32xf32> -> vector<16x32xf32>
    %c0_46 = arith.constant 0 : index
    %c0_47 = arith.constant 0 : index
    %81 = vector.load %arg6[%c0_46, %c0_47] : memref<1x32xf32, #tpu.memory_space<vmem>>, vector<1x32xf32>
    %82 = vector.broadcast %81 : vector<1x32xf32> to vector<16x32xf32>
    %83 = arith.addf %80, %82 : vector<16x32xf32>
    %84 = arith.addf %2, %83 : vector<16x32xf32>
    %cst_48 = arith.constant dense<0.000000e+00> : vector<16xf32>
    %85 = vector.multi_reduction <add>, %84, %cst_48 [1] : vector<16x32xf32> to vector<16xf32>
    %86 = vector.shape_cast %85 : vector<16xf32> to vector<16x1xf32>
    %cst_49 = arith.constant 3.200000e+01 : f32
    %87 = vector.broadcast %cst_49 : f32 to vector<16x1xf32>
    %88 = arith.divf %86, %87 : vector<16x1xf32>
    %89 = vector.broadcast %88 : vector<16x1xf32> to vector<16x32xf32>
    %90 = arith.subf %84, %89 : vector<16x32xf32>
    %91 = arith.mulf %90, %90 : vector<16x32xf32>
    %cst_50 = arith.constant dense<0.000000e+00> : vector<16xf32>
    %92 = vector.multi_reduction <add>, %91, %cst_50 [1] : vector<16x32xf32> to vector<16xf32>
    %93 = vector.shape_cast %92 : vector<16xf32> to vector<16x1xf32>
    %cst_51 = arith.constant 3.200000e+01 : f32
    %94 = vector.broadcast %cst_51 : f32 to vector<16x1xf32>
    %95 = arith.divf %93, %94 : vector<16x1xf32>
    %96 = vector.broadcast %88 : vector<16x1xf32> to vector<16x32xf32>
    %97 = arith.subf %84, %96 : vector<16x32xf32>
    %cst_52 = arith.constant 9.99999974E-6 : f32
    %98 = vector.broadcast %cst_52 : f32 to vector<16x1xf32>
    %99 = arith.addf %95, %98 : vector<16x1xf32>
    %100 = math.rsqrt %99 : vector<16x1xf32>
    %101 = vector.broadcast %100 : vector<16x1xf32> to vector<16x32xf32>
    %102 = arith.mulf %97, %101 : vector<16x32xf32>
    %c0_53 = arith.constant 0 : index
    %c0_54 = arith.constant 0 : index
    %103 = vector.load %arg7[%c0_53, %c0_54] : memref<1x32xf32, #tpu.memory_space<vmem>>, vector<1x32xf32>
    %104 = vector.broadcast %103 : vector<1x32xf32> to vector<16x32xf32>
    %105 = arith.mulf %102, %104 : vector<16x32xf32>
    %c0_55 = arith.constant 0 : index
    %c0_56 = arith.constant 0 : index
    %106 = vector.load %arg8[%c0_55, %c0_56] : memref<1x32xf32, #tpu.memory_space<vmem>>, vector<1x32xf32>
    %107 = vector.broadcast %106 : vector<1x32xf32> to vector<16x32xf32>
    %108 = arith.addf %105, %107 : vector<16x32xf32>
    %c0_57 = arith.constant 0 : index
    %c0_58 = arith.constant 0 : index
    %c0_59 = arith.constant 0 : index
    %109 = vector.load %arg9[%c0_57, %c0_58, %c0_59] : memref<1x16x32xf32, #tpu.memory_space<vmem>>, vector<1x16x32xf32>
    %110 = vector.shape_cast %109 : vector<1x16x32xf32> to vector<16x32xf32>
    %111 = vector.shape_cast %108 : vector<16x32xf32> to vector<1x16x32xf32>
    tpu.vector_store %arg9[%c0_57, %c0_58, %c0_59], %111 {strides = array<i32>} : memref<1x16x32xf32, #tpu.memory_space<vmem>>, vector<1x16x32xf32>,
    return
  }
  func.func @transform_0(%arg0: i32, %arg1: i32) -> (i32, i32, i32, i32) {
    %c0_i32 = arith.constant 0 : i32
    %c0_i32_0 = arith.constant 0 : i32
    %c0_i32_1 = arith.constant 0 : i32
    return %arg0, %c0_i32, %arg1, %c0_i32_0 : i32, i32, i32, i32
  }
  func.func @transform_1(%arg0: i32, %arg1: i32) -> (i32, i32, i32) {
    %c0_i32 = arith.constant 0 : i32
    %c0_i32_0 = arith.constant 0 : i32
    %c0_i32_1 = arith.constant 0 : i32
    %c0_i32_2 = arith.constant 0 : i32
    return %c0_i32, %c0_i32_0, %c0_i32_1 : i32, i32, i32
  }
  func.func @transform_2(%arg0: i32, %arg1: i32) -> (i32, i32) {
    %c0_i32 = arith.constant 0 : i32
    %c0_i32_0 = arith.constant 0 : i32
    %c0_i32_1 = arith.constant 0 : i32
    return %c0_i32, %c0_i32_0 : i32, i32
  }
  func.func @transform_3(%arg0: i32, %arg1: i32) -> (i32, i32) {
    %c0_i32 = arith.constant 0 : i32
    %c0_i32_0 = arith.constant 0 : i32
    %c0_i32_1 = arith.constant 0 : i32
    return %c0_i32, %c0_i32_0 : i32, i32
  }
  func.func @transform_4(%arg0: i32, %arg1: i32) -> (i32, i32) {
    %c0_i32 = arith.constant 0 : i32
    %c0_i32_0 = arith.constant 0 : i32
    %c0_i32_1 = arith.constant 0 : i32
    return %c0_i32, %c0_i32_0 : i32, i32
  }
  func.func @transform_5(%arg0: i32, %arg1: i32) -> (i32, i32) {
    %c0_i32 = arith.constant 0 : i32
    %c0_i32_0 = arith.constant 0 : i32
    %c0_i32_1 = arith.constant 0 : i32
    return %c0_i32, %c0_i32_0 : i32, i32
  }
  func.func @transform_6(%arg0: i32, %arg1: i32) -> (i32, i32) {
    %c0_i32 = arith.constant 0 : i32
    %c0_i32_0 = arith.constant 0 : i32
    %c0_i32_1 = arith.constant 0 : i32
    return %c0_i32, %c0_i32_0 : i32, i32
  }
  func.func @transform_7(%arg0: i32, %arg1: i32) -> (i32, i32, i32) {
    %c0_i32 = arith.constant 0 : i32
    %c0_i32_0 = arith.constant 0 : i32
    return %arg0, %arg1, %c0_i32 : i32, i32, i32
  }
}

</mosaic_0001>

<llo_original>
// kernel: tpu_custom_call.1
$region0: #{tpu_custom_call.1}
  #allocation0 [shape = 'u32[]', space=smem, size = 0x4, offset = 0x4, fixed_abs, tag = 'smem constant byte address 0x4 - core index']
  #allocation1 [shape = 'u32[144,128]{1,0:T(1,128)}', space=vmem, size = 0x12000, scoped, tag = 'internal scratch']
  %s0 = inlined_call_operand.hbm [shape: f32[2,12,16,32], index: 0, kind: input, shape index: {}]
  %s1 = inlined_call_operand.hbm [shape: f32[12,32,64], index: 1, kind: input, shape index: {}]
  %s2 = inlined_call_operand.vmem [shape: f32[1,64], index: 2, kind: input, shape index: {}]
  %s3 = inlined_call_operand.vmem [shape: f32[64,32], index: 3, kind: input, shape index: {}]
  %s4 = inlined_call_operand.vmem [shape: f32[1,32], index: 4, kind: input, shape index: {}]
  %s5 = inlined_call_operand.vmem [shape: f32[1,32], index: 5, kind: input, shape index: {}]
  %s6 = inlined_call_operand.vmem [shape: f32[1,32], index: 6, kind: input, shape index: {}]
  %s7 = inlined_call_operand.hbm [shape: f32[2,16,32], index: 7, kind: output, shape index: {}]
  %s8 = sld [smem:[#allocation0]]
  $region69: #{tpu_custom_call.1} parent=0
    _
  %s10 = ssub.s32 1, %s8
  %s11 = scalar_select 0, %s10, %s8
  $region1: #{tpu_custom_call.1} parent=0
    #allocation2 [shape = 'u8[196608]{0}', space=vmem, size = 0x30000, scoped, tag = 'input window, operand 0']
    #allocation3 [shape = 's32[2]{0}', space=sflag, size = 0x8, scoped, tag = 'scoped memory for tpu_custom_call.1']
    #allocation4 [shape = 's32[2]{0}', space=sflag, size = 0x8, scoped, tag = 'scoped memory for tpu_custom_call.1']
    #allocation5 [shape = 'u8[196608]{0}', space=vmem, size = 0x30000, scoped, tag = 'input window, operand 1, single buffered']
    #allocation6 [shape = 's32[1]{0}', space=sflag, size = 0x4, scoped, tag = 'scoped memory for tpu_custom_call.1']
    #allocation7 [shape = 'u8[16384]{0}', space=vmem, size = 0x4000, scoped, tag = 'output window, operand 0']
    %12 = vsyncpa [#allocation3], 0
    %s13 = scalar_lea.sflag [#allocation3], 1
    %14 = vsyncpa %s13, 0
    %15 = vsyncpa [#allocation6], 0
    %16 = vsyncpa [#allocation4], 0
    %s17 = scalar_lea.sflag [#allocation4], 1
    %18 = vsyncpa %s17, 0
    loop: start=0, step=1, limit=4
    $region2: #{tpu_custom_call.1} parent=1 // loop_pre_header
      _
    $region3: #{tpu_custom_call.1} parent=1 // loop_header
      %s20 = sphi 0, %s24
      %p21 = scmp.ge.s32.totalorder %s20, 4
      %s27 = sphi 0, %s39
      %s28 = sphi 0, %s35
      %s29 = sphi 0, %s27
      %s30 = sphi 0, %s28
      %s31 = sphi 0, %s29
      %s32 = sphi 0, %s30
      %s44 = sphi 0, %s46
      %s47 = sphi 0, %s44
      %s48 = sphi 0, %s47
      %s64 = sphi 0, %s48
      %s68 = sphi 0, %s68
      %s70 = sphi 0, %s68
      %s71 = sphi 0, %s70
      %s85 = sphi 0, %s71
      %s89 = sphi 0, %s89
      %s91 = sphi 0, %s89
      %s92 = sphi 0, %s91
      %s106 = sphi 0, %s92
      %s110 = sphi 0, %s110
      %s112 = sphi 0, %s110
      %s113 = sphi 0, %s112
      %s127 = sphi 0, %s113
      %s131 = sphi 0, %s131
      %s133 = sphi 0, %s131
      %s134 = sphi 0, %s133
      %s148 = sphi 0, %s134
      %s152 = sphi 0, %s152
      %s154 = sphi 0, %s152
      %s155 = sphi 0, %s154
      %s169 = sphi 0, %s155
      %s173 = sphi 0, %s173
      %s175 = sphi 0, %s173
      %s176 = sphi 0, %s175
      %s190 = sphi 0, %s176
      %s198 = sphi 0, %s200
      %s201 = sphi 0, %s198
      %s202 = sphi 0, %s201
      %s218 = sphi 0, %s202
    $region4: #{tpu_custom_call.1} parent=1 // loop_header_branch
      %23 = sbr.rel (%p21) target = $region8
    $region5: #{tpu_custom_call.1} parent=1 // loop_body
      %s25 = ssub.s32 %s20, 1
      %s26 = ssub.s32 %s20, 2
      %s33 = sadd.s32 1, %s28
      %p34 = scmp.ge.s32.totalorder %s33, 1
      %s35 = scalar_select %p34, 0, %s33
      %s36 = sadd.s32 1, %s27
      %s37 = scalar_select %p34, %s36, %s27
      %p38 = scmp.ge.s32.totalorder %s37, 2
      %s39 = scalar_select %p38, 0, %s37
      %s40 = ssub.s32 %s27, %s39
      %s41 = ssub.s32 %s28, %s35
      %s42 = sor.u32 %s40, %s41
      %p43 = scmp.eq.s32.totalorder %s42, 0
      %s45 = sadd.s32 %s44, 1
      %s46 = scalar_select %p43, %s44, %s45
      %p49 = pneg %p43
      %p50 = scmp.eq.s32.totalorder %s20, 1
      %p51 = por %p49, %p50
      %p52 = scmp.ne.s32.totalorder %s44, %s47
      %p53 = scmp.eq.s32.totalorder %s20, 0
      %p54 = por %p52, %p53
      %p55 = scmp.ne.s32.totalorder %s44, %s47
      %p56 = scmp.eq.s32.totalorder %s25, 1
      %p57 = por %p55, %p56
      %p58 = scmp.ne.s32.totalorder %s47, %s48
      %p59 = scmp.eq.s32.totalorder %s25, 0
      %p60 = por %p58, %p59
      %p61 = scmp.ne.s32.totalorder %s47, %s48
      %p62 = scmp.eq.s32.totalorder %s26, 1
      %p63 = por %p61, %p62
      %p65 = scmp.ne.s32.totalorder %s48, %s64
      %p66 = scmp.eq.s32.totalorder %s26, 0
      %p67 = por %p65, %p66
      %s69 = sadd.s32 %s68, 1
      %p72 = scmp.eq.s32.totalorder %s20, 1
      %p73 = scmp.ne.s32.totalorder %s68, %s70
      %p74 = scmp.eq.s32.totalorder %s20, 0
      %p75 = por %p73, %p74
      %p76 = scmp.ne.s32.totalorder %s68, %s70
      %p77 = scmp.eq.s32.totalorder %s25, 1
      %p78 = por %p76, %p77
      %p79 = scmp.ne.s32.totalorder %s70, %s71
      %p80 = scmp.eq.s32.totalorder %s25, 0
      %p81 = por %p79, %p80
      %p82 = scmp.ne.s32.totalorder %s70, %s71
      %p83 = scmp.eq.s32.totalorder %s26, 1
      %p84 = por %p82, %p83
      %p86 = scmp.ne.s32.totalorder %s71, %s85
      %p87 = scmp.eq.s32.totalorder %s26, 0
      %p88 = por %p86, %p87
      %s90 = sadd.s32 %s89, 1
      %p93 = scmp.eq.s32.totalorder %s20, 1
      %p94 = scmp.ne.s32.totalorder %s89, %s91
      %p95 = scmp.eq.s32.totalorder %s20, 0
      %p96 = por %p94, %p95
      %p97 = scmp.ne.s32.totalorder %s89, %s91
      %p98 = scmp.eq.s32.totalorder %s25, 1
      %p99 = por %p97, %p98
      %p100 = scmp.ne.s32.totalorder %s91, %s92
      %p101 = scmp.eq.s32.totalorder %s25, 0
      %p102 = por %p100, %p101
      %p103 = scmp.ne.s32.totalorder %s91, %s92
      %p104 = scmp.eq.s32.totalorder %s26, 1
      %p105 = por %p103, %p104
      %p107 = scmp.ne.s32.totalorder %s92, %s106
      %p108 = scmp.eq.s32.totalorder %s26, 0
      %p109 = por %p107, %p108
      %s111 = sadd.s32 %s110, 1
      %p114 = scmp.eq.s32.totalorder %s20, 1
      %p115 = scmp.ne.s32.totalorder %s110, %s112
      %p116 = scmp.eq.s32.totalorder %s20, 0
      %p117 = por %p115, %p116
      %p118 = scmp.ne.s32.totalorder %s110, %s112
      %p119 = scmp.eq.s32.totalorder %s25, 1
      %p120 = por %p118, %p119
      %p121 = scmp.ne.s32.totalorder %s112, %s113
      %p122 = scmp.eq.s32.totalorder %s25, 0
      %p123 = por %p121, %p122
      %p124 = scmp.ne.s32.totalorder %s112, %s113
      %p125 = scmp.eq.s32.totalorder %s26, 1
      %p126 = por %p124, %p125
      %p128 = scmp.ne.s32.totalorder %s113, %s127
      %p129 = scmp.eq.s32.totalorder %s26, 0
      %p130 = por %p128, %p129
      %s132 = sadd.s32 %s131, 1
      %p135 = scmp.eq.s32.totalorder %s20, 1
      %p136 = scmp.ne.s32.totalorder %s131, %s133
      %p137 = scmp.eq.s32.totalorder %s20, 0
      %p138 = por %p136, %p137
      %p139 = scmp.ne.s32.totalorder %s131, %s133
      %p140 = scmp.eq.s32.totalorder %s25, 1
      %p141 = por %p139, %p140
      %p142 = scmp.ne.s32.totalorder %s133, %s134
      %p143 = scmp.eq.s32.totalorder %s25, 0
      %p144 = por %p142, %p143
      %p145 = scmp.ne.s32.totalorder %s133, %s134
      %p146 = scmp.eq.s32.totalorder %s26, 1
      %p147 = por %p145, %p146
      %p149 = scmp.ne.s32.totalorder %s134, %s148
      %p150 = scmp.eq.s32.totalorder %s26, 0
      %p151 = por %p149, %p150
      %s153 = sadd.s32 %s152, 1
      %p156 = scmp.eq.s32.totalorder %s20, 1
      %p157 = scmp.ne.s32.totalorder %s152, %s154
      %p158 = scmp.eq.s32.totalorder %s20, 0
      %p159 = por %p157, %p158
      %p160 = scmp.ne.s32.totalorder %s152, %s154
      %p161 = scmp.eq.s32.totalorder %s25, 1
      %p162 = por %p160, %p161
      %p163 = scmp.ne.s32.totalorder %s154, %s155
      %p164 = scmp.eq.s32.totalorder %s25, 0
      %p165 = por %p163, %p164
      %p166 = scmp.ne.s32.totalorder %s154, %s155
      %p167 = scmp.eq.s32.totalorder %s26, 1
      %p168 = por %p166, %p167
      %p170 = scmp.ne.s32.totalorder %s155, %s169
      %p171 = scmp.eq.s32.totalorder %s26, 0
      %p172 = por %p170, %p171
      %s174 = sadd.s32 %s173, 1
      %p177 = scmp.eq.s32.totalorder %s20, 1
      %p178 = scmp.ne.s32.totalorder %s173, %s175
      %p179 = scmp.eq.s32.totalorder %s20, 0
      %p180 = por %p178, %p179
      %p181 = scmp.ne.s32.totalorder %s173, %s175
      %p182 = scmp.eq.s32.totalorder %s25, 1
      %p183 = por %p181, %p182
      %p184 = scmp.ne.s32.totalorder %s175, %s176
      %p185 = scmp.eq.s32.totalorder %s25, 0
      %p186 = por %p184, %p185
      %p187 = scmp.ne.s32.totalorder %s175, %s176
      %p188 = scmp.eq.s32.totalorder %s26, 1
      %p189 = por %p187, %p188
      %p191 = scmp.ne.s32.totalorder %s176, %s190
      %p192 = scmp.eq.s32.totalorder %s26, 0
      %p193 = por %p191, %p192
      %s194 = ssub.s32 %s27, %s39
      %s195 = ssub.s32 %s28, %s35
      %s196 = sor.u32 %s194, %s195
      %p197 = scmp.eq.s32.totalorder %s196, 0
      %s199 = sadd.s32 %s198, 1
      %s200 = scalar_select %p197, %s198, %s199
      %p203 = pneg %p197
      %p204 = scmp.eq.s32.totalorder %s20, 1
      %p205 = por %p203, %p204
      %p206 = scmp.ne.s32.totalorder %s198, %s201
      %p207 = scmp.eq.s32.totalorder %s20, 0
      %p208 = por %p206, %p207
      %p209 = scmp.ne.s32.totalorder %s198, %s201
      %p210 = scmp.eq.s32.totalorder %s25, 1
      %p211 = por %p209, %p210
      %p212 = scmp.ne.s32.totalorder %s201, %s202
      %p213 = scmp.eq.s32.totalorder %s25, 0
      %p214 = por %p212, %p213
      %p215 = scmp.ne.s32.totalorder %s201, %s202
      %p216 = scmp.eq.s32.totalorder %s26, 1
      %p217 = por %p215, %p216
      %p219 = scmp.ne.s32.totalorder %s202, %s218
      %p220 = scmp.eq.s32.totalorder %s26, 0
      %p221 = por %p219, %p220
      %p222 = scmp.le.s32.totalorder 1, %s20
      %p223 = scmp.lt.s32.totalorder %s20, 3
      %p224 = pnand %p222, %p223
      %p225 = pneg %p224
      // Predicated region
      $region9: #{tpu_custom_call.1} parent=5 // pred_check
        _
      $region10: #{tpu_custom_call.1} parent=5 // pred_check_branch
        %227 = sbr.rel (%p224) target = $region12
      $region11: #{tpu_custom_call.1} parent=5 // pred_region
        %s228 = ssub.s32 %s20, 1
        // Predicated region
        $region13: #{tpu_custom_call.1} parent=11 // pred_check
          %p229 = pneg %p81
        $region14: #{tpu_custom_call.1} parent=11 // pred_check_branch
          %231 = sbr.rel (%p229) target = $region16
        $region15: #{tpu_custom_call.1} parent=11 // pred_region
          %s233 = ssub.s32 6144, 6144
          %234 = vsyncadd [#allocation6], %s233
          %s235 = sshll.u32 [#allocation5], 4
          %s236 = int_to_ptr.vmem [resolvable:$true] %s235
          %241 = dma.hbm_to_vmem [thread:$0]  %s1, 6144, %s236, [#allocation6], 128, 128, 8
        $region16: #{tpu_custom_call.1} parent=11 // pred_fallthru
          _
        // Predicated region
        $region17: #{tpu_custom_call.1} parent=11 // pred_check
          %p242 = pneg %p102
        $region18: #{tpu_custom_call.1} parent=11 // pred_check_branch
          %244 = sbr.rel (%p242) target = $region20
        $region19: #{tpu_custom_call.1} parent=11 // pred_region
          _
        $region20: #{tpu_custom_call.1} parent=11 // pred_fallthru
          _
        // Predicated region
        $region21: #{tpu_custom_call.1} parent=11 // pred_check
          %p245 = pneg %p123
        $region22: #{tpu_custom_call.1} parent=11 // pred_check_branch
          %247 = sbr.rel (%p245) target = $region24
        $region23: #{tpu_custom_call.1} parent=11 // pred_region
          _
        $region24: #{tpu_custom_call.1} parent=11 // pred_fallthru
          _
        // Predicated region
        $region25: #{tpu_custom_call.1} parent=11 // pred_check
          %p248 = pneg %p144
        $region26: #{tpu_custom_call.1} parent=11 // pred_check_branch
          %250 = sbr.rel (%p248) target = $region28
        $region27: #{tpu_custom_call.1} parent=11 // pred_region
          _
        $region28: #{tpu_custom_call.1} parent=11 // pred_fallthru
          _
        // Predicated region
        $region29: #{tpu_custom_call.1} parent=11 // pred_check
          %p251 = pneg %p165
        $region30: #{tpu_custom_call.1} parent=11 // pred_check_branch
          %253 = sbr.rel (%p251) target = $region32
        $region31: #{tpu_custom_call.1} parent=11 // pred_region
          _
        $region32: #{tpu_custom_call.1} parent=11 // pred_fallthru
          _
        // Predicated region
        $region33: #{tpu_custom_call.1} parent=11 // pred_check
          %p254 = pneg %p186
        $region34: #{tpu_custom_call.1} parent=11 // pred_check_branch
          %256 = sbr.rel (%p254) target = $region36
        $region35: #{tpu_custom_call.1} parent=11 // pred_region
          _
        $region36: #{tpu_custom_call.1} parent=11 // pred_fallthru
          _
      $region12: #{tpu_custom_call.1} parent=5 // pred_fallthru
        _
      %p257 = scmp.lt.s32.totalorder %s20, 2
      // Predicated region
      $region37: #{tpu_custom_call.1} parent=5 // pred_check
        %p258 = pneg %p257
      $region38: #{tpu_custom_call.1} parent=5 // pred_check_branch
        %260 = sbr.rel (%p258) target = $region40
      $region39: #{tpu_custom_call.1} parent=5 // pred_region
        // Predicated region
        $region41: #{tpu_custom_call.1} parent=39 // pred_check
          %p261 = pneg %p54
        $region42: #{tpu_custom_call.1} parent=39 // pred_check_branch
          %263 = sbr.rel (%p261) target = $region44
        $region43: #{tpu_custom_call.1} parent=39 // pred_region
          %s264 = sand.u32 %s44, 1
          %s265 = scalar_lea.sflag [#allocation3], %s264
          %s266 = sand.u32 %s44, 1
          %s267 = smul.addr %s266, 192
          %s268 = scalar_lea.vmem [#allocation2], %s267
          %s269 = smul.u32 2, %s28
          %s271 = ssub.s32 3072, 3072
          %272 = vsyncadd %s265, %s271
          %s273 = smul.addr %s27, 24
          %s274 = sadd.s32 %s269, %s273
          %s275 = smul.addr %s274, 128
          %s276 = scalar_lea.hbm %s0, %s275
          %s277 = sshll.u32 %s268, 4
          %s278 = int_to_ptr.vmem [resolvable:$true] %s277
          %283 = dma.hbm_to_vmem [thread:$0]  %s276, 3072, %s278, %s265, 128, 128, 8
        $region44: #{tpu_custom_call.1} parent=39 // pred_fallthru
          _
      $region40: #{tpu_custom_call.1} parent=5 // pred_fallthru
        _
      %p284 = scmp.le.s32.totalorder 1, %s20
      %p285 = scmp.lt.s32.totalorder %s20, 3
      %p286 = pnand %p284, %p285
      %p287 = pneg %p286
      // Predicated region
      $region45: #{tpu_custom_call.1} parent=5 // pred_check
        _
      $region46: #{tpu_custom_call.1} parent=5 // pred_check_branch
        %289 = sbr.rel (%p286) target = $region48
      $region47: #{tpu_custom_call.1} parent=5 // pred_region
        %s290 = ssub.s32 %s20, 1
        %s291 = sand.u32 %s47, 1
        %s292 = scalar_lea.sflag [#allocation3], %s291
        %s293 = sand.u32 %s47, 1
        %s294 = smul.addr %s293, 192
        %s295 = scalar_lea.vmem [#allocation2], %s294
        // Predicated region
        $region49: #{tpu_custom_call.1} parent=47 // pred_check
          %p296 = pneg %p60
        $region50: #{tpu_custom_call.1} parent=47 // pred_check_branch
          %298 = sbr.rel (%p296) target = $region52
        $region51: #{tpu_custom_call.1} parent=47 // pred_region
          %299 = dma.done %s292, 3072
        $region52: #{tpu_custom_call.1} parent=47 // pred_fallthru
          _
        // Predicated region
        $region53: #{tpu_custom_call.1} parent=47 // pred_check
          %p300 = pneg %p81
        $region54: #{tpu_custom_call.1} parent=47 // pred_check_branch
          %302 = sbr.rel (%p300) target = $region56
        $region55: #{tpu_custom_call.1} parent=47 // pred_region
          %303 = dma.done [#allocation6], 6144
        $region56: #{tpu_custom_call.1} parent=47 // pred_fallthru
          _
        %s304 = sand.u32 %s47, 1
        %s305 = scalar_lea.sflag [#allocation3], %s304
        %s306 = sand.u32 %s47, 1
        %s307 = smul.addr %s306, 192
        %s308 = scalar_lea.vmem [#allocation2], %s307
        %p309 = pneg %p60
        %p310 = pneg %p57
        %p311 = pneg %p81
        %p312 = pneg %p78
        %p313 = pneg %p102
        %p314 = pneg %p99
        %p315 = pneg %p123
        %p316 = pneg %p120
        %p317 = pneg %p144
        %p318 = pneg %p141
        %p319 = pneg %p165
        %p320 = pneg %p162
        %p321 = pneg %p186
        %p322 = pneg %p183
        %p323 = pneg %p214
        %p324 = pneg %p211
        %s325 = sand.u32 %s201, 1
        %s326 = scalar_lea.sflag [#allocation4], %s325
        %s327 = sand.u32 %s201, 1
        %s328 = smul.addr %s327, 16
        %s329 = scalar_lea.vmem [#allocation7], %s328
        %s330 = smul.u32 2, %s30
        %s331 = smul.u32 2, %s30
        %v332 = vld [vmem:[%s295] sm:$0xff]
        %v333 = vld [vmem:[%s295 + $0x8] sm:$0xff]
        %v334 = vld [vmem:[%s295 + $0x10] sm:$0xff]
        %v335 = vld [vmem:[%s295 + $0x18] sm:$0xff]
        %v336 = vld [vmem:[%s295 + $0x20] sm:$0xff]
        %v337 = vld [vmem:[%s295 + $0x28] sm:$0xff]
        %v338 = vld [vmem:[%s295 + $0x30] sm:$0xff]
        %v339 = vld [vmem:[%s295 + $0x38] sm:$0xff]
        %v340 = vld [vmem:[%s295 + $0x40] sm:$0xff]
        %v341 = vld [vmem:[%s295 + $0x48] sm:$0xff]
        %v342 = vld [vmem:[%s295 + $0x50] sm:$0xff]
        %v343 = vld [vmem:[%s295 + $0x58] sm:$0xff]
        %v344 = vld [vmem:[%s295 + $0x60] sm:$0xff]
        %v345 = vld [vmem:[%s295 + $0x68] sm:$0xff]
        %v346 = vld [vmem:[%s295 + $0x70] sm:$0xff]
        %v347 = vld [vmem:[%s295 + $0x78] sm:$0xff]
        %v348 = vld [vmem:[%s295 + $0x80] sm:$0xff]
        %v349 = vld [vmem:[%s295 + $0x88] sm:$0xff]
        %v350 = vld [vmem:[%s295 + $0x90] sm:$0xff]
        %v351 = vld [vmem:[%s295 + $0x98] sm:$0xff]
        %v352 = vld [vmem:[%s295 + $0xa0] sm:$0xff]
        %v353 = vld [vmem:[%s295 + $0xa8] sm:$0xff]
        %v354 = vld [vmem:[%s295 + $0xb0] sm:$0xff]
        %v355 = vld [vmem:[%s295 + $0xb8] sm:$0xff]
        %vm356 = vcmask 261120
        %v357 = vsel %vm356, %v332, -inf
        %v358 = vsel %vm356, %v334, -inf
        %v359 = vsel %vm356, %v336, -inf
        %v360 = vmax.f32 %v357, %v359
        %v361 = vsel %vm356, %v338, -inf
        %v362 = vmax.f32 %v358, %v361
        %v363 = vsel %vm356, %v340, -inf
        %v364 = vmax.f32 %v360, %v363
        %v365 = vsel %vm356, %v342, -inf
        %v366 = vmax.f32 %v362, %v365
        %v367 = vsel %vm356, %v344, -inf
        %v368 = vmax.f32 %v364, %v367
        %v369 = vsel %vm356, %v346, -inf
        %v370 = vmax.f32 %v366, %v369
        %v371 = vsel %vm356, %v348, -inf
        %v372 = vmax.f32 %v368, %v371
        %v373 = vsel %vm356, %v350, -inf
        %v374 = vmax.f32 %v370, %v373
        %v375 = vsel %vm356, %v352, -inf
        %v376 = vmax.f32 %v372, %v375
        %v377 = vsel %vm356, %v354, -inf
        %v378 = vmax.f32 %v374, %v377
        %v379 = vmax.f32 %v376, %v378
        %v380 = vsel %vm356, %v333, -inf
        %v381 = vsel %vm356, %v335, -inf
        %v382 = vsel %vm356, %v337, -inf
        %v383 = vmax.f32 %v380, %v382
        %v384 = vsel %vm356, %v339, -inf
        %v385 = vmax.f32 %v381, %v384
        %v386 = vsel %vm356, %v341, -inf
        %v387 = vmax.f32 %v383, %v386
        %v388 = vsel %vm356, %v343, -inf
        %v389 = vmax.f32 %v385, %v388
        %v390 = vsel %vm356, %v345, -inf
        %v391 = vmax.f32 %v387, %v390
        %v392 = vsel %vm356, %v347, -inf
        %v393 = vmax.f32 %v389, %v392
        %v394 = vsel %vm356, %v349, -inf
        %v395 = vmax.f32 %v391, %v394
        %v396 = vsel %vm356, %v351, -inf
        %v397 = vmax.f32 %v393, %v396
        %v398 = vsel %vm356, %v353, -inf
        %v399 = vmax.f32 %v395, %v398
        %v400 = vsel %vm356, %v355, -inf
        %v401 = vmax.f32 %v397, %v400
        %v402 = vmax.f32 %v399, %v401
        %v403 = vld [vmem:[#allocation5] sm:$0xff]
        %v404 = vld [vmem:[#allocation5 + $0x8] sm:$0xff]
        %v405 = vld [vmem:[#allocation5 + $0x10] sm:$0xff]
        %v406 = vld [vmem:[#allocation5 + $0x18] sm:$0xff]
        %s407 = scalar_lea.vmem [#allocation5], 32
        %v408 = vld [vmem:[%s407] sm:$0xff]
        %v409 = vld [vmem:[%s407 + $0x8] sm:$0xff]
        %v410 = vld [vmem:[%s407 + $0x10] sm:$0xff]
        %v411 = vld [vmem:[%s407 + $0x18] sm:$0xff]
        %v413 = vsel %vm356, %v334, 0
        %v416 = vsel %vm356, %v335, 0
        %418 = vmatprep.subr.mxu0 0.0
        %419 = vmatpush1.msra.mxu0 %v408
        %420 = vmatprep.subr.mxu0 0.0
        %421 = vmatpush1.msra.mxu0 %v409
        %422 = vmatprep.subr.mxu0 0.0
        %423 = vmatpush1.msra.mxu0 %v410
        %424 = vmatprep.subr.mxu0 0.0
        %425 = vmatpush1.msra.mxu0 %v411
        %426 = vmatprep.subr.mxu0 0.0
        %427 = vmatpush1.msra.mxu0 0.0
        %428 = vmatprep.subr.mxu0 0.0
        %429 = vmatpush1.msra.mxu0 0.0
        %430 = vmatprep.subr.mxu0 0.0
        %431 = vmatpush1.msra.mxu0 0.0
        %432 = vmatprep.subr.mxu0 0.0
        %433 = vmatpush1.msra.mxu0 0.0
        %434 = vmatprep.subr.mxu0 0.0
        %435 = vmatpush1.msra.mxu0 0.0
        %436 = vmatprep.subr.mxu0 0.0
        %437 = vmatpush1.msra.mxu0 0.0
        %438 = vmatprep.subr.mxu0 0.0
        %439 = vmatpush1.msra.mxu0 0.0
        %440 = vmatprep.subr.mxu0 0.0
        %441 = vmatpush1.msra.mxu0 0.0
        %442 = vmatprep.subr.mxu0 0.0
        %443 = vmatpush1.msra.mxu0 0.0
        %444 = vmatprep.subr.mxu0 0.0
        %445 = vmatpush1.msra.mxu0 0.0
        %446 = vmatprep.subr.mxu0 0.0
        %447 = vmatpush1.msra.mxu0 0.0
        %448 = vmatprep.subr.mxu0 0.0
        %449 = vmatpush1.msra.mxu0 0.0
        %450 = vmatprep.subr.mxu0 0.0
        %451 = vmatpush1.msra.mxu0 0.0
        %452 = vmatprep.subr.mxu0 0.0
        %453 = vmatpush1.msra.mxu0 0.0
        %454 = vmatprep.subr.mxu0 0.0
        %455 = vmatpush1.msra.mxu0 0.0
        %456 = vmatprep.subr.mxu0 0.0
        %457 = vmatpush1.msra.mxu0 0.0
        %458 = vmatprep.subr.mxu0 0.0
        %459 = vmatpush1.msra.mxu0 0.0
        %460 = vmatprep.subr.mxu0 0.0
        %461 = vmatpush1.msra.mxu0 0.0
        %462 = vmatprep.subr.mxu0 0.0
        %463 = vmatpush1.msra.mxu0 0.0
        %464 = vmatprep.subr.mxu0 0.0
        %465 = vmatpush1.msra.mxu0 0.0
        %466 = vmatprep.subr.mxu0 0.0
        %467 = vmatpush1.msra.mxu0 0.0
        %468 = vmatprep.subr.mxu0 0.0
        %469 = vmatpush1.msra.mxu0 0.0
        %470 = vmatprep.subr.mxu0 0.0
        %471 = vmatpush1.msra.mxu0 0.0
        %472 = vmatprep.subr.mxu0 0.0
        %473 = vmatpush1.msra.mxu0 0.0
        %474 = vmatprep.subr.mxu0 0.0
        %475 = vmatpush1.msra.mxu0 0.0
        %476 = vmatprep.subr.mxu0 0.0
        %477 = vmatpush1.msra.mxu0 0.0
        %478 = vmatprep.subr.mxu0 0.0
        %479 = vmatpush1.msra.mxu0 0.0
        %480 = vmatprep.subr.mxu0 0.0
        %481 = vmatpush1.msra.mxu0 0.0
        %482 = vmatprep.mubr.f32.mxu0 0.0
        %483 = vmatmul.mubr.f32.gmra.mrb[0].mxu0 %v413
        %v484 = vpop.f32.mrb[0].mxu0
        %v485 = vadd.f32 0.0, %v484
        %v486 = vpop.f32.mrb[0].mxu0
        %487 = vmatprep.mubr.f32.mxu0 0.0
        %488 = vmatmul.mubr.f32.gmra.mrb[0].mxu0 %v416
        %v489 = vpop.f32.mrb[0].mxu0
        %v490 = vadd.f32 0.0, %v489
        %v491 = vpop.f32.mrb[0].mxu0
        %492 = vdwg.mxu0
        %v494 = vsel %vm356, %v332, 0
        %v497 = vsel %vm356, %v333, 0
        %499 = vmatprep.subr.mxu0 0.0
        %500 = vmatpush1.msra.mxu0 %v403
        %501 = vmatprep.subr.mxu0 0.0
        %502 = vmatpush1.msra.mxu0 %v404
        %503 = vmatprep.subr.mxu0 0.0
        %504 = vmatpush1.msra.mxu0 %v405
        %505 = vmatprep.subr.mxu0 0.0
        %506 = vmatpush1.msra.mxu0 %v406
        %507 = vmatprep.subr.mxu0 0.0
        %508 = vmatpush1.msra.mxu0 0.0
        %509 = vmatprep.subr.mxu0 0.0
        %510 = vmatpush1.msra.mxu0 0.0
        %511 = vmatprep.subr.mxu0 0.0
        %512 = vmatpush1.msra.mxu0 0.0
        %513 = vmatprep.subr.mxu0 0.0
        %514 = vmatpush1.msra.mxu0 0.0
        %515 = vmatprep.subr.mxu0 0.0
        %516 = vmatpush1.msra.mxu0 0.0
        %517 = vmatprep.subr.mxu0 0.0
        %518 = vmatpush1.msra.mxu0 0.0
        %519 = vmatprep.subr.mxu0 0.0
        %520 = vmatpush1.msra.mxu0 0.0
        %521 = vmatprep.subr.mxu0 0.0
        %522 = vmatpush1.msra.mxu0 0.0
        %523 = vmatprep.subr.mxu0 0.0
        %524 = vmatpush1.msra.mxu0 0.0
        %525 = vmatprep.subr.mxu0 0.0
        %526 = vmatpush1.msra.mxu0 0.0
        %527 = vmatprep.subr.mxu0 0.0
        %528 = vmatpush1.msra.mxu0 0.0
        %529 = vmatprep.subr.mxu0 0.0
        %530 = vmatpush1.msra.mxu0 0.0
        %531 = vmatprep.subr.mxu0 0.0
        %532 = vmatpush1.msra.mxu0 0.0
        %533 = vmatprep.subr.mxu0 0.0
        %534 = vmatpush1.msra.mxu0 0.0
        %535 = vmatprep.subr.mxu0 0.0
        %536 = vmatpush1.msra.mxu0 0.0
        %537 = vmatprep.subr.mxu0 0.0
        %538 = vmatpush1.msra.mxu0 0.0
        %539 = vmatprep.subr.mxu0 0.0
        %540 = vmatpush1.msra.mxu0 0.0
        %541 = vmatprep.subr.mxu0 0.0
        %542 = vmatpush1.msra.mxu0 0.0
        %543 = vmatprep.subr.mxu0 0.0
        %544 = vmatpush1.msra.mxu0 0.0
        %545 = vmatprep.subr.mxu0 0.0
        %546 = vmatpush1.msra.mxu0 0.0
        %547 = vmatprep.subr.mxu0 0.0
        %548 = vmatpush1.msra.mxu0 0.0
        %549 = vmatprep.subr.mxu0 0.0
        %550 = vmatpush1.msra.mxu0 0.0
        %551 = vmatprep.subr.mxu0 0.0
        %552 = vmatpush1.msra.mxu0 0.0
        %553 = vmatprep.subr.mxu0 0.0
        %554 = vmatpush1.msra.mxu0 0.0
        %555 = vmatprep.subr.mxu0 0.0
        %556 = vmatpush1.msra.mxu0 0.0
        %557 = vmatprep.subr.mxu0 0.0
        %558 = vmatpush1.msra.mxu0 0.0
        %559 = vmatprep.subr.mxu0 0.0
        %560 = vmatpush1.msra.mxu0 0.0
        %561 = vmatprep.subr.mxu0 0.0
        %562 = vmatpush1.msra.mxu0 0.0
        %563 = vmatprep.mubr.f32.mxu0 0.0
        %564 = vmatmul.mubr.f32.gmra.mrb[0].mxu0 %v494
        %v565 = vpop.f32.mrb[0].mxu0
        %v566 = vadd.f32 %v485, %v565
        %v567 = vpop.f32.mrb[0].mxu0
        %568 = vmatprep.mubr.f32.mxu0 0.0
        %569 = vmatmul.mubr.f32.gmra.mrb[0].mxu0 %v497
        %v570 = vpop.f32.mrb[0].mxu0
        %v571 = vadd.f32 %v490, %v570
        %v572 = vpop.f32.mrb[0].mxu0
        %573 = vdwg.mxu0
        %s574 = scalar_lea.vmem [#allocation5], 64
        %v575 = vld [vmem:[%s574] sm:$0xff]
        %v576 = vld [vmem:[%s574 + $0x8] sm:$0xff]
        %v577 = vld [vmem:[%s574 + $0x10] sm:$0xff]
        %v578 = vld [vmem:[%s574 + $0x18] sm:$0xff]
        %v580 = vsel %vm356, %v336, 0
        %v583 = vsel %vm356, %v337, 0
        %585 = vmatprep.subr.mxu0 0.0
        %586 = vmatpush1.msra.mxu0 %v575
        %587 = vmatprep.subr.mxu0 0.0
        %588 = vmatpush1.msra.mxu0 %v576
        %589 = vmatprep.subr.mxu0 0.0
        %590 = vmatpush1.msra.mxu0 %v577
        %591 = vmatprep.subr.mxu0 0.0
        %592 = vmatpush1.msra.mxu0 %v578
        %593 = vmatprep.subr.mxu0 0.0
        %594 = vmatpush1.msra.mxu0 0.0
        %595 = vmatprep.subr.mxu0 0.0
        %596 = vmatpush1.msra.mxu0 0.0
        %597 = vmatprep.subr.mxu0 0.0
        %598 = vmatpush1.msra.mxu0 0.0
        %599 = vmatprep.subr.mxu0 0.0
        %600 = vmatpush1.msra.mxu0 0.0
        %601 = vmatprep.subr.mxu0 0.0
        %602 = vmatpush1.msra.mxu0 0.0
        %603 = vmatprep.subr.mxu0 0.0
        %604 = vmatpush1.msra.mxu0 0.0
        %605 = vmatprep.subr.mxu0 0.0
        %606 = vmatpush1.msra.mxu0 0.0
        %607 = vmatprep.subr.mxu0 0.0
        %608 = vmatpush1.msra.mxu0 0.0
        %609 = vmatprep.subr.mxu0 0.0
        %610 = vmatpush1.msra.mxu0 0.0
        %611 = vmatprep.subr.mxu0 0.0
        %612 = vmatpush1.msra.mxu0 0.0
        %613 = vmatprep.subr.mxu0 0.0
        %614 = vmatpush1.msra.mxu0 0.0
        %615 = vmatprep.subr.mxu0 0.0
        %616 = vmatpush1.msra.mxu0 0.0
        %617 = vmatprep.subr.mxu0 0.0
        %618 = vmatpush1.msra.mxu0 0.0
        %619 = vmatprep.subr.mxu0 0.0
        %620 = vmatpush1.msra.mxu0 0.0
        %621 = vmatprep.subr.mxu0 0.0
        %622 = vmatpush1.msra.mxu0 0.0
        %623 = vmatprep.subr.mxu0 0.0
        %624 = vmatpush1.msra.mxu0 0.0
        %625 = vmatprep.subr.mxu0 0.0
        %626 = vmatpush1.msra.mxu0 0.0
        %627 = vmatprep.subr.mxu0 0.0
        %628 = vmatpush1.msra.mxu0 0.0
        %629 = vmatprep.subr.mxu0 0.0
        %630 = vmatpush1.msra.mxu0 0.0
        %631 = vmatprep.subr.mxu0 0.0
        %632 = vmatpush1.msra.mxu0 0.0
        %633 = vmatprep.subr.mxu0 0.0
        %634 = vmatpush1.msra.mxu0 0.0
        %635 = vmatprep.subr.mxu0 0.0
        %636 = vmatpush1.msra.mxu0 0.0
        %637 = vmatprep.subr.mxu0 0.0
        %638 = vmatpush1.msra.mxu0 0.0
        %639 = vmatprep.subr.mxu0 0.0
        %640 = vmatpush1.msra.mxu0 0.0
        %641 = vmatprep.subr.mxu0 0.0
        %642 = vmatpush1.msra.mxu0 0.0
        %643 = vmatprep.subr.mxu0 0.0
        %644 = vmatpush1.msra.mxu0 0.0
        %645 = vmatprep.subr.mxu0 0.0
        %646 = vmatpush1.msra.mxu0 0.0
        %647 = vmatprep.subr.mxu0 0.0
        %648 = vmatpush1.msra.mxu0 0.0
        %649 = vmatprep.mubr.f32.mxu0 0.0
        %650 = vmatmul.mubr.f32.gmra.mrb[0].mxu0 %v580
        %v651 = vpop.f32.mrb[0].mxu0
        %v652 = vadd.f32 0.0, %v651
        %v653 = vpop.f32.mrb[0].mxu0
        %654 = vmatprep.mubr.f32.mxu0 0.0
        %655 = vmatmul.mubr.f32.gmra.mrb[0].mxu0 %v583
        %v656 = vpop.f32.mrb[0].mxu0
        %v657 = vadd.f32 0.0, %v656
        %v658 = vpop.f32.mrb[0].mxu0
        %659 = vdwg.mxu0
        %v660 = vadd.f32 %v566, %v652
        %v661 = vadd.f32 %v571, %v657
        %s662 = scalar_lea.vmem [#allocation5], 96
        %v663 = vld [vmem:[%s662] sm:$0xff]
        %v664 = vld [vmem:[%s662 + $0x8] sm:$0xff]
        %v665 = vld [vmem:[%s662 + $0x10] sm:$0xff]
        %v666 = vld [vmem:[%s662 + $0x18] sm:$0xff]
        %v668 = vsel %vm356, %v338, 0
        %v671 = vsel %vm356, %v339, 0
        %673 = vmatprep.subr.mxu0 0.0
        %674 = vmatpush1.msra.mxu0 %v663
        %675 = vmatprep.subr.mxu0 0.0
        %676 = vmatpush1.msra.mxu0 %v664
        %677 = vmatprep.subr.mxu0 0.0
        %678 = vmatpush1.msra.mxu0 %v665
        %679 = vmatprep.subr.mxu0 0.0
        %680 = vmatpush1.msra.mxu0 %v666
        %681 = vmatprep.subr.mxu0 0.0
        %682 = vmatpush1.msra.mxu0 0.0
        %683 = vmatprep.subr.mxu0 0.0
        %684 = vmatpush1.msra.mxu0 0.0
        %685 = vmatprep.subr.mxu0 0.0
        %686 = vmatpush1.msra.mxu0 0.0
        %687 = vmatprep.subr.mxu0 0.0
        %688 = vmatpush1.msra.mxu0 0.0
        %689 = vmatprep.subr.mxu0 0.0
        %690 = vmatpush1.msra.mxu0 0.0
        %691 = vmatprep.subr.mxu0 0.0
        %692 = vmatpush1.msra.mxu0 0.0
        %693 = vmatprep.subr.mxu0 0.0
        %694 = vmatpush1.msra.mxu0 0.0
        %695 = vmatprep.subr.mxu0 0.0
        %696 = vmatpush1.msra.mxu0 0.0
        %697 = vmatprep.subr.mxu0 0.0
        %698 = vmatpush1.msra.mxu0 0.0
        %699 = vmatprep.subr.mxu0 0.0
        %700 = vmatpush1.msra.mxu0 0.0
        %701 = vmatprep.subr.mxu0 0.0
        %702 = vmatpush1.msra.mxu0 0.0
        %703 = vmatprep.subr.mxu0 0.0
        %704 = vmatpush1.msra.mxu0 0.0
        %705 = vmatprep.subr.mxu0 0.0
        %706 = vmatpush1.msra.mxu0 0.0
        %707 = vmatprep.subr.mxu0 0.0
        %708 = vmatpush1.msra.mxu0 0.0
        %709 = vmatprep.subr.mxu0 0.0
        %710 = vmatpush1.msra.mxu0 0.0
        %711 = vmatprep.subr.mxu0 0.0
        %712 = vmatpush1.msra.mxu0 0.0
        %713 = vmatprep.subr.mxu0 0.0
        %714 = vmatpush1.msra.mxu0 0.0
        %715 = vmatprep.subr.mxu0 0.0
        %716 = vmatpush1.msra.mxu0 0.0
        %717 = vmatprep.subr.mxu0 0.0
        %718 = vmatpush1.msra.mxu0 0.0
        %719 = vmatprep.subr.mxu0 0.0
        %720 = vmatpush1.msra.mxu0 0.0
        %721 = vmatprep.subr.mxu0 0.0
        %722 = vmatpush1.msra.mxu0 0.0
        %723 = vmatprep.subr.mxu0 0.0
        %724 = vmatpush1.msra.mxu0 0.0
        %725 = vmatprep.subr.mxu0 0.0
        %726 = vmatpush1.msra.mxu0 0.0
        %727 = vmatprep.subr.mxu0 0.0
        %728 = vmatpush1.msra.mxu0 0.0
        %729 = vmatprep.subr.mxu0 0.0
        %730 = vmatpush1.msra.mxu0 0.0
        %731 = vmatprep.subr.mxu0 0.0
        %732 = vmatpush1.msra.mxu0 0.0
        %733 = vmatprep.subr.mxu0 0.0
        %734 = vmatpush1.msra.mxu0 0.0
        %735 = vmatprep.subr.mxu0 0.0
        %736 = vmatpush1.msra.mxu0 0.0
        %737 = vmatprep.mubr.f32.mxu0 0.0
        %738 = vmatmul.mubr.f32.gmra.mrb[0].mxu0 %v668
        %v739 = vpop.f32.mrb[0].mxu0
        %v740 = vadd.f32 0.0, %v739
        %v741 = vpop.f32.mrb[0].mxu0
        %742 = vmatprep.mubr.f32.mxu0 0.0
        %743 = vmatmul.mubr.f32.gmra.mrb[0].mxu0 %v671
        %v744 = vpop.f32.mrb[0].mxu0
        %v745 = vadd.f32 0.0, %v744
        %v746 = vpop.f32.mrb[0].mxu0
        %747 = vdwg.mxu0
        %v748 = vadd.f32 %v660, %v740
        %v749 = vadd.f32 %v661, %v745
        %s750 = scalar_lea.vmem [#allocation5], 128
        %v751 = vld [vmem:[%s750] sm:$0xff]
        %v752 = vld [vmem:[%s750 + $0x8] sm:$0xff]
        %v753 = vld [vmem:[%s750 + $0x10] sm:$0xff]
        %v754 = vld [vmem:[%s750 + $0x18] sm:$0xff]
        %v756 = vsel %vm356, %v340, 0
        %v759 = vsel %vm356, %v341, 0
        %761 = vmatprep.subr.mxu0 0.0
        %762 = vmatpush1.msra.mxu0 %v751
        %763 = vmatprep.subr.mxu0 0.0
        %764 = vmatpush1.msra.mxu0 %v752
        %765 = vmatprep.subr.mxu0 0.0
        %766 = vmatpush1.msra.mxu0 %v753
        %767 = vmatprep.subr.mxu0 0.0
        %768 = vmatpush1.msra.mxu0 %v754
        %769 = vmatprep.subr.mxu0 0.0
        %770 = vmatpush1.msra.mxu0 0.0
        %771 = vmatprep.subr.mxu0 0.0
        %772 = vmatpush1.msra.mxu0 0.0
        %773 = vmatprep.subr.mxu0 0.0
        %774 = vmatpush1.msra.mxu0 0.0
        %775 = vmatprep.subr.mxu0 0.0
        %776 = vmatpush1.msra.mxu0 0.0
        %777 = vmatprep.subr.mxu0 0.0
        %778 = vmatpush1.msra.mxu0 0.0
        %779 = vmatprep.subr.mxu0 0.0
        %780 = vmatpush1.msra.mxu0 0.0
        %781 = vmatprep.subr.mxu0 0.0
        %782 = vmatpush1.msra.mxu0 0.0
        %783 = vmatprep.subr.mxu0 0.0
        %784 = vmatpush1.msra.mxu0 0.0
        %785 = vmatprep.subr.mxu0 0.0
        %786 = vmatpush1.msra.mxu0 0.0
        %787 = vmatprep.subr.mxu0 0.0
        %788 = vmatpush1.msra.mxu0 0.0
        %789 = vmatprep.subr.mxu0 0.0
        %790 = vmatpush1.msra.mxu0 0.0
        %791 = vmatprep.subr.mxu0 0.0
        %792 = vmatpush1.msra.mxu0 0.0
        %793 = vmatprep.subr.mxu0 0.0
        %794 = vmatpush1.msra.mxu0 0.0
        %795 = vmatprep.subr.mxu0 0.0
        %796 = vmatpush1.msra.mxu0 0.0
        %797 = vmatprep.subr.mxu0 0.0
        %798 = vmatpush1.msra.mxu0 0.0
        %799 = vmatprep.subr.mxu0 0.0
        %800 = vmatpush1.msra.mxu0 0.0
        %801 = vmatprep.subr.mxu0 0.0
        %802 = vmatpush1.msra.mxu0 0.0
        %803 = vmatprep.subr.mxu0 0.0
        %804 = vmatpush1.msra.mxu0 0.0
        %805 = vmatprep.subr.mxu0 0.0
        %806 = vmatpush1.msra.mxu0 0.0
        %807 = vmatprep.subr.mxu0 0.0
        %808 = vmatpush1.msra.mxu0 0.0
        %809 = vmatprep.subr.mxu0 0.0
        %810 = vmatpush1.msra.mxu0 0.0
        %811 = vmatprep.subr.mxu0 0.0
        %812 = vmatpush1.msra.mxu0 0.0
        %813 = vmatprep.subr.mxu0 0.0
        %814 = vmatpush1.msra.mxu0 0.0
        %815 = vmatprep.subr.mxu0 0.0
        %816 = vmatpush1.msra.mxu0 0.0
        %817 = vmatprep.subr.mxu0 0.0
        %818 = vmatpush1.msra.mxu0 0.0
        %819 = vmatprep.subr.mxu0 0.0
        %820 = vmatpush1.msra.mxu0 0.0
        %821 = vmatprep.subr.mxu0 0.0
        %822 = vmatpush1.msra.mxu0 0.0
        %823 = vmatprep.subr.mxu0 0.0
        %824 = vmatpush1.msra.mxu0 0.0
        %825 = vmatprep.mubr.f32.mxu0 0.0
        %826 = vmatmul.mubr.f32.gmra.mrb[0].mxu0 %v756
        %v827 = vpop.f32.mrb[0].mxu0
        %v828 = vadd.f32 0.0, %v827
        %v829 = vpop.f32.mrb[0].mxu0
        %830 = vmatprep.mubr.f32.mxu0 0.0
        %831 = vmatmul.mubr.f32.gmra.mrb[0].mxu0 %v759
        %v832 = vpop.f32.mrb[0].mxu0
        %v833 = vadd.f32 0.0, %v832
        %v834 = vpop.f32.mrb[0].mxu0
        %835 = vdwg.mxu0
        %v836 = vadd.f32 %v748, %v828
        %v837 = vadd.f32 %v749, %v833
        %s838 = scalar_lea.vmem [#allocation5], 160
        %v839 = vld [vmem:[%s838] sm:$0xff]
        %v840 = vld [vmem:[%s838 + $0x8] sm:$0xff]
        %v841 = vld [vmem:[%s838 + $0x10] sm:$0xff]
        %v842 = vld [vmem:[%s838 + $0x18] sm:$0xff]
        %v844 = vsel %vm356, %v342, 0
        %v847 = vsel %vm356, %v343, 0
        %849 = vmatprep.subr.mxu0 0.0
        %850 = vmatpush1.msra.mxu0 %v839
        %851 = vmatprep.subr.mxu0 0.0
        %852 = vmatpush1.msra.mxu0 %v840
        %853 = vmatprep.subr.mxu0 0.0
        %854 = vmatpush1.msra.mxu0 %v841
        %855 = vmatprep.subr.mxu0 0.0
        %856 = vmatpush1.msra.mxu0 %v842
        %857 = vmatprep.subr.mxu0 0.0
        %858 = vmatpush1.msra.mxu0 0.0
        %859 = vmatprep.subr.mxu0 0.0
        %860 = vmatpush1.msra.mxu0 0.0
        %861 = vmatprep.subr.mxu0 0.0
        %862 = vmatpush1.msra.mxu0 0.0
        %863 = vmatprep.subr.mxu0 0.0
        %864 = vmatpush1.msra.mxu0 0.0
        %865 = vmatprep.subr.mxu0 0.0
        %866 = vmatpush1.msra.mxu0 0.0
        %867 = vmatprep.subr.mxu0 0.0
        %868 = vmatpush1.msra.mxu0 0.0
        %869 = vmatprep.subr.mxu0 0.0
        %870 = vmatpush1.msra.mxu0 0.0
        %871 = vmatprep.subr.mxu0 0.0
        %872 = vmatpush1.msra.mxu0 0.0
        %873 = vmatprep.subr.mxu0 0.0
        %874 = vmatpush1.msra.mxu0 0.0
        %875 = vmatprep.subr.mxu0 0.0
        %876 = vmatpush1.msra.mxu0 0.0
        %877 = vmatprep.subr.mxu0 0.0
        %878 = vmatpush1.msra.mxu0 0.0
        %879 = vmatprep.subr.mxu0 0.0
        %880 = vmatpush1.msra.mxu0 0.0
        %881 = vmatprep.subr.mxu0 0.0
        %882 = vmatpush1.msra.mxu0 0.0
        %883 = vmatprep.subr.mxu0 0.0
        %884 = vmatpush1.msra.mxu0 0.0
        %885 = vmatprep.subr.mxu0 0.0
        %886 = vmatpush1.msra.mxu0 0.0
        %887 = vmatprep.subr.mxu0 0.0
        %888 = vmatpush1.msra.mxu0 0.0
        %889 = vmatprep.subr.mxu0 0.0
        %890 = vmatpush1.msra.mxu0 0.0
        %891 = vmatprep.subr.mxu0 0.0
        %892 = vmatpush1.msra.mxu0 0.0
        %893 = vmatprep.subr.mxu0 0.0
        %894 = vmatpush1.msra.mxu0 0.0
        %895 = vmatprep.subr.mxu0 0.0
        %896 = vmatpush1.msra.mxu0 0.0
        %897 = vmatprep.subr.mxu0 0.0
        %898 = vmatpush1.msra.mxu0 0.0
        %899 = vmatprep.subr.mxu0 0.0
        %900 = vmatpush1.msra.mxu0 0.0
        %901 = vmatprep.subr.mxu0 0.0
        %902 = vmatpush1.msra.mxu0 0.0
        %903 = vmatprep.subr.mxu0 0.0
        %904 = vmatpush1.msra.mxu0 0.0
        %905 = vmatprep.subr.mxu0 0.0
        %906 = vmatpush1.msra.mxu0 0.0
        %907 = vmatprep.subr.mxu0 0.0
        %908 = vmatpush1.msra.mxu0 0.0
        %909 = vmatprep.subr.mxu0 0.0
        %910 = vmatpush1.msra.mxu0 0.0
        %911 = vmatprep.subr.mxu0 0.0
        %912 = vmatpush1.msra.mxu0 0.0
        %913 = vmatprep.mubr.f32.mxu0 0.0
        %914 = vmatmul.mubr.f32.gmra.mrb[0].mxu0 %v844
        %v915 = vpop.f32.mrb[0].mxu0
        %v916 = vadd.f32 0.0, %v915
        %v917 = vpop.f32.mrb[0].mxu0
        %918 = vmatprep.mubr.f32.mxu0 0.0
        %919 = vmatmul.mubr.f32.gmra.mrb[0].mxu0 %v847
        %v920 = vpop.f32.mrb[0].mxu0
        %v921 = vadd.f32 0.0, %v920
        %v922 = vpop.f32.mrb[0].mxu0
        %923 = vdwg.mxu0
        %v924 = vadd.f32 %v836, %v916
        %v925 = vadd.f32 %v837, %v921
        %s926 = scalar_lea.vmem [#allocation5], 192
        %v927 = vld [vmem:[%s926] sm:$0xff]
        %v928 = vld [vmem:[%s926 + $0x8] sm:$0xff]
        %v929 = vld [vmem:[%s926 + $0x10] sm:$0xff]
        %v930 = vld [vmem:[%s926 + $0x18] sm:$0xff]
        %v932 = vsel %vm356, %v344, 0
        %v935 = vsel %vm356, %v345, 0
        %937 = vmatprep.subr.mxu0 0.0
        %938 = vmatpush1.msra.mxu0 %v927
        %939 = vmatprep.subr.mxu0 0.0
        %940 = vmatpush1.msra.mxu0 %v928
        %941 = vmatprep.subr.mxu0 0.0
        %942 = vmatpush1.msra.mxu0 %v929
        %943 = vmatprep.subr.mxu0 0.0
        %944 = vmatpush1.msra.mxu0 %v930
        %945 = vmatprep.subr.mxu0 0.0
        %946 = vmatpush1.msra.mxu0 0.0
        %947 = vmatprep.subr.mxu0 0.0
        %948 = vmatpush1.msra.mxu0 0.0
        %949 = vmatprep.subr.mxu0 0.0
        %950 = vmatpush1.msra.mxu0 0.0
        %951 = vmatprep.subr.mxu0 0.0
        %952 = vmatpush1.msra.mxu0 0.0
        %953 = vmatprep.subr.mxu0 0.0
        %954 = vmatpush1.msra.mxu0 0.0
        %955 = vmatprep.subr.mxu0 0.0
        %956 = vmatpush1.msra.mxu0 0.0
        %957 = vmatprep.subr.mxu0 0.0
        %958 = vmatpush1.msra.mxu0 0.0
        %959 = vmatprep.subr.mxu0 0.0
        %960 = vmatpush1.msra.mxu0 0.0
        %961 = vmatprep.subr.mxu0 0.0
        %962 = vmatpush1.msra.mxu0 0.0
        %963 = vmatprep.subr.mxu0 0.0
        %964 = vmatpush1.msra.mxu0 0.0
        %965 = vmatprep.subr.mxu0 0.0
        %966 = vmatpush1.msra.mxu0 0.0
        %967 = vmatprep.subr.mxu0 0.0
        %968 = vmatpush1.msra.mxu0 0.0
        %969 = vmatprep.subr.mxu0 0.0
        %970 = vmatpush1.msra.mxu0 0.0
        %971 = vmatprep.subr.mxu0 0.0
        %972 = vmatpush1.msra.mxu0 0.0
        %973 = vmatprep.subr.mxu0 0.0
        %974 = vmatpush1.msra.mxu0 0.0
        %975 = vmatprep.subr.mxu0 0.0
        %976 = vmatpush1.msra.mxu0 0.0
        %977 = vmatprep.subr.mxu0 0.0
        %978 = vmatpush1.msra.mxu0 0.0
        %979 = vmatprep.subr.mxu0 0.0
        %980 = vmatpush1.msra.mxu0 0.0
        %981 = vmatprep.subr.mxu0 0.0
        %982 = vmatpush1.msra.mxu0 0.0
        %983 = vmatprep.subr.mxu0 0.0
        %984 = vmatpush1.msra.mxu0 0.0
        %985 = vmatprep.subr.mxu0 0.0
        %986 = vmatpush1.msra.mxu0 0.0
        %987 = vmatprep.subr.mxu0 0.0
        %988 = vmatpush1.msra.mxu0 0.0
        %989 = vmatprep.subr.mxu0 0.0
        %990 = vmatpush1.msra.mxu0 0.0
        %991 = vmatprep.subr.mxu0 0.0
        %992 = vmatpush1.msra.mxu0 0.0
        %993 = vmatprep.subr.mxu0 0.0
        %994 = vmatpush1.msra.mxu0 0.0
        %995 = vmatprep.subr.mxu0 0.0
        %996 = vmatpush1.msra.mxu0 0.0
        %997 = vmatprep.subr.mxu0 0.0
        %998 = vmatpush1.msra.mxu0 0.0
        %999 = vmatprep.subr.mxu0 0.0
        %1000 = vmatpush1.msra.mxu0 0.0
        %1001 = vmatprep.mubr.f32.mxu0 0.0
        %1002 = vmatmul.mubr.f32.gmra.mrb[0].mxu0 %v932
        %v1003 = vpop.f32.mrb[0].mxu0
        %v1004 = vadd.f32 0.0, %v1003
        %v1005 = vpop.f32.mrb[0].mxu0
        %1006 = vmatprep.mubr.f32.mxu0 0.0
        %1007 = vmatmul.mubr.f32.gmra.mrb[0].mxu0 %v935
        %v1008 = vpop.f32.mrb[0].mxu0
        %v1009 = vadd.f32 0.0, %v1008
        %v1010 = vpop.f32.mrb[0].mxu0
        %1011 = vdwg.mxu0
        %v1012 = vadd.f32 %v924, %v1004
        %v1013 = vadd.f32 %v925, %v1009
        %s1014 = scalar_lea.vmem [#allocation5], 224
        %v1015 = vld [vmem:[%s1014] sm:$0xff]
        %v1016 = vld [vmem:[%s1014 + $0x8] sm:$0xff]
        %v1017 = vld [vmem:[%s1014 + $0x10] sm:$0xff]
        %v1018 = vld [vmem:[%s1014 + $0x18] sm:$0xff]
        %v1020 = vsel %vm356, %v346, 0
        %v1023 = vsel %vm356, %v347, 0
        %1025 = vmatprep.subr.mxu0 0.0
        %1026 = vmatpush1.msra.mxu0 %v1015
        %1027 = vmatprep.subr.mxu0 0.0
        %1028 = vmatpush1.msra.mxu0 %v1016
        %1029 = vmatprep.subr.mxu0 0.0
        %1030 = vmatpush1.msra.mxu0 %v1017
        %1031 = vmatprep.subr.mxu0 0.0
        %1032 = vmatpush1.msra.mxu0 %v1018
        %1033 = vmatprep.subr.mxu0 0.0
        %1034 = vmatpush1.msra.mxu0 0.0
        %1035 = vmatprep.subr.mxu0 0.0
        %1036 = vmatpush1.msra.mxu0 0.0
        %1037 = vmatprep.subr.mxu0 0.0
        %1038 = vmatpush1.msra.mxu0 0.0
        %1039 = vmatprep.subr.mxu0 0.0
        %1040 = vmatpush1.msra.mxu0 0.0
        %1041 = vmatprep.subr.mxu0 0.0
        %1042 = vmatpush1.msra.mxu0 0.0
        %1043 = vmatprep.subr.mxu0 0.0
        %1044 = vmatpush1.msra.mxu0 0.0
        %1045 = vmatprep.subr.mxu0 0.0
        %1046 = vmatpush1.msra.mxu0 0.0
        %1047 = vmatprep.subr.mxu0 0.0
        %1048 = vmatpush1.msra.mxu0 0.0
        %1049 = vmatprep.subr.mxu0 0.0
        %1050 = vmatpush1.msra.mxu0 0.0
        %1051 = vmatprep.subr.mxu0 0.0
        %1052 = vmatpush1.msra.mxu0 0.0
        %1053 = vmatprep.subr.mxu0 0.0
        %1054 = vmatpush1.msra.mxu0 0.0
        %1055 = vmatprep.subr.mxu0 0.0
        %1056 = vmatpush1.msra.mxu0 0.0
        %1057 = vmatprep.subr.mxu0 0.0
        %1058 = vmatpush1.msra.mxu0 0.0
        %1059 = vmatprep.subr.mxu0 0.0
        %1060 = vmatpush1.msra.mxu0 0.0
        %1061 = vmatprep.subr.mxu0 0.0
        %1062 = vmatpush1.msra.mxu0 0.0
        %1063 = vmatprep.subr.mxu0 0.0
        %1064 = vmatpush1.msra.mxu0 0.0
        %1065 = vmatprep.subr.mxu0 0.0
        %1066 = vmatpush1.msra.mxu0 0.0
        %1067 = vmatprep.subr.mxu0 0.0
        %1068 = vmatpush1.msra.mxu0 0.0
        %1069 = vmatprep.subr.mxu0 0.0
        %1070 = vmatpush1.msra.mxu0 0.0
        %1071 = vmatprep.subr.mxu0 0.0
        %1072 = vmatpush1.msra.mxu0 0.0
        %1073 = vmatprep.subr.mxu0 0.0
        %1074 = vmatpush1.msra.mxu0 0.0
        %1075 = vmatprep.subr.mxu0 0.0
        %1076 = vmatpush1.msra.mxu0 0.0
        %1077 = vmatprep.subr.mxu0 0.0
        %1078 = vmatpush1.msra.mxu0 0.0
        %1079 = vmatprep.subr.mxu0 0.0
        %1080 = vmatpush1.msra.mxu0 0.0
        %1081 = vmatprep.subr.mxu0 0.0
        %1082 = vmatpush1.msra.mxu0 0.0
        %1083 = vmatprep.subr.mxu0 0.0
        %1084 = vmatpush1.msra.mxu0 0.0
        %1085 = vmatprep.subr.mxu0 0.0
        %1086 = vmatpush1.msra.mxu0 0.0
        %1087 = vmatprep.subr.mxu0 0.0
        %1088 = vmatpush1.msra.mxu0 0.0
        %1089 = vmatprep.mubr.f32.mxu0 0.0
        %1090 = vmatmul.mubr.f32.gmra.mrb[0].mxu0 %v1020
        %v1091 = vpop.f32.mrb[0].mxu0
        %v1092 = vadd.f32 0.0, %v1091
        %v1093 = vpop.f32.mrb[0].mxu0
        %1094 = vmatprep.mubr.f32.mxu0 0.0
        %1095 = vmatmul.mubr.f32.gmra.mrb[0].mxu0 %v1023
        %v1096 = vpop.f32.mrb[0].mxu0
        %v1097 = vadd.f32 0.0, %v1096
        %v1098 = vpop.f32.mrb[0].mxu0
        %1099 = vdwg.mxu0
        %v1100 = vadd.f32 %v1012, %v1092
        %v1101 = vadd.f32 %v1013, %v1097
        %s1102 = scalar_lea.vmem [#allocation5], 256
        %v1103 = vld [vmem:[%s1102] sm:$0xff]
        %v1104 = vld [vmem:[%s1102 + $0x8] sm:$0xff]
        %v1105 = vld [vmem:[%s1102 + $0x10] sm:$0xff]
        %v1106 = vld [vmem:[%s1102 + $0x18] sm:$0xff]
        %v1108 = vsel %vm356, %v348, 0
        %v1111 = vsel %vm356, %v349, 0
        %1113 = vmatprep.subr.mxu0 0.0
        %1114 = vmatpush1.msra.mxu0 %v1103
        %1115 = vmatprep.subr.mxu0 0.0
        %1116 = vmatpush1.msra.mxu0 %v1104
        %1117 = vmatprep.subr.mxu0 0.0
        %1118 = vmatpush1.msra.mxu0 %v1105
        %1119 = vmatprep.subr.mxu0 0.0
        %1120 = vmatpush1.msra.mxu0 %v1106
        %1121 = vmatprep.subr.mxu0 0.0
        %1122 = vmatpush1.msra.mxu0 0.0
        %1123 = vmatprep.subr.mxu0 0.0
        %1124 = vmatpush1.msra.mxu0 0.0
        %1125 = vmatprep.subr.mxu0 0.0
        %1126 = vmatpush1.msra.mxu0 0.0
        %1127 = vmatprep.subr.mxu0 0.0
        %1128 = vmatpush1.msra.mxu0 0.0
        %1129 = vmatprep.subr.mxu0 0.0
        %1130 = vmatpush1.msra.mxu0 0.0
        %1131 = vmatprep.subr.mxu0 0.0
        %1132 = vmatpush1.msra.mxu0 0.0
        %1133 = vmatprep.subr.mxu0 0.0
        %1134 = vmatpush1.msra.mxu0 0.0
        %1135 = vmatprep.subr.mxu0 0.0
        %1136 = vmatpush1.msra.mxu0 0.0
        %1137 = vmatprep.subr.mxu0 0.0
        %1138 = vmatpush1.msra.mxu0 0.0
        %1139 = vmatprep.subr.mxu0 0.0
        %1140 = vmatpush1.msra.mxu0 0.0
        %1141 = vmatprep.subr.mxu0 0.0
        %1142 = vmatpush1.msra.mxu0 0.0
        %1143 = vmatprep.subr.mxu0 0.0
        %1144 = vmatpush1.msra.mxu0 0.0
        %1145 = vmatprep.subr.mxu0 0.0
        %1146 = vmatpush1.msra.mxu0 0.0
        %1147 = vmatprep.subr.mxu0 0.0
        %1148 = vmatpush1.msra.mxu0 0.0
        %1149 = vmatprep.subr.mxu0 0.0
        %1150 = vmatpush1.msra.mxu0 0.0
        %1151 = vmatprep.subr.mxu0 0.0
        %1152 = vmatpush1.msra.mxu0 0.0
        %1153 = vmatprep.subr.mxu0 0.0
        %1154 = vmatpush1.msra.mxu0 0.0
        %1155 = vmatprep.subr.mxu0 0.0
        %1156 = vmatpush1.msra.mxu0 0.0
        %1157 = vmatprep.subr.mxu0 0.0
        %1158 = vmatpush1.msra.mxu0 0.0
        %1159 = vmatprep.subr.mxu0 0.0
        %1160 = vmatpush1.msra.mxu0 0.0
        %1161 = vmatprep.subr.mxu0 0.0
        %1162 = vmatpush1.msra.mxu0 0.0
        %1163 = vmatprep.subr.mxu0 0.0
        %1164 = vmatpush1.msra.mxu0 0.0
        %1165 = vmatprep.subr.mxu0 0.0
        %1166 = vmatpush1.msra.mxu0 0.0
        %1167 = vmatprep.subr.mxu0 0.0
        %1168 = vmatpush1.msra.mxu0 0.0
        %1169 = vmatprep.subr.mxu0 0.0
        %1170 = vmatpush1.msra.mxu0 0.0
        %1171 = vmatprep.subr.mxu0 0.0
        %1172 = vmatpush1.msra.mxu0 0.0
        %1173 = vmatprep.subr.mxu0 0.0
        %1174 = vmatpush1.msra.mxu0 0.0
        %1175 = vmatprep.subr.mxu0 0.0
        %1176 = vmatpush1.msra.mxu0 0.0
        %1177 = vmatprep.mubr.f32.mxu0 0.0
        %1178 = vmatmul.mubr.f32.gmra.mrb[0].mxu0 %v1108
        %v1179 = vpop.f32.mrb[0].mxu0
        %v1180 = vadd.f32 0.0, %v1179
        %v1181 = vpop.f32.mrb[0].mxu0
        %1182 = vmatprep.mubr.f32.mxu0 0.0
        %1183 = vmatmul.mubr.f32.gmra.mrb[0].mxu0 %v1111
        %v1184 = vpop.f32.mrb[0].mxu0
        %v1185 = vadd.f32 0.0, %v1184
        %v1186 = vpop.f32.mrb[0].mxu0
        %1187 = vdwg.mxu0
        %v1188 = vadd.f32 %v1100, %v1180
        %v1189 = vadd.f32 %v1101, %v1185
        %s1190 = scalar_lea.vmem [#allocation5], 288
        %v1191 = vld [vmem:[%s1190] sm:$0xff]
        %v1192 = vld [vmem:[%s1190 + $0x8] sm:$0xff]
        %v1193 = vld [vmem:[%s1190 + $0x10] sm:$0xff]
        %v1194 = vld [vmem:[%s1190 + $0x18] sm:$0xff]
        %v1196 = vsel %vm356, %v350, 0
        %v1199 = vsel %vm356, %v351, 0
        %1201 = vmatprep.subr.mxu0 0.0
        %1202 = vmatpush1.msra.mxu0 %v1191
        %1203 = vmatprep.subr.mxu0 0.0
        %1204 = vmatpush1.msra.mxu0 %v1192
        %1205 = vmatprep.subr.mxu0 0.0
        %1206 = vmatpush1.msra.mxu0 %v1193
        %1207 = vmatprep.subr.mxu0 0.0
        %1208 = vmatpush1.msra.mxu0 %v1194
        %1209 = vmatprep.subr.mxu0 0.0
        %1210 = vmatpush1.msra.mxu0 0.0
        %1211 = vmatprep.subr.mxu0 0.0
        %1212 = vmatpush1.msra.mxu0 0.0
        %1213 = vmatprep.subr.mxu0 0.0
        %1214 = vmatpush1.msra.mxu0 0.0
        %1215 = vmatprep.subr.mxu0 0.0
        %1216 = vmatpush1.msra.mxu0 0.0
        %1217 = vmatprep.subr.mxu0 0.0
        %1218 = vmatpush1.msra.mxu0 0.0
        %1219 = vmatprep.subr.mxu0 0.0
        %1220 = vmatpush1.msra.mxu0 0.0
        %1221 = vmatprep.subr.mxu0 0.0
        %1222 = vmatpush1.msra.mxu0 0.0
        %1223 = vmatprep.subr.mxu0 0.0
        %1224 = vmatpush1.msra.mxu0 0.0
        %1225 = vmatprep.subr.mxu0 0.0
        %1226 = vmatpush1.msra.mxu0 0.0
        %1227 = vmatprep.subr.mxu0 0.0
        %1228 = vmatpush1.msra.mxu0 0.0
        %1229 = vmatprep.subr.mxu0 0.0
        %1230 = vmatpush1.msra.mxu0 0.0
        %1231 = vmatprep.subr.mxu0 0.0
        %1232 = vmatpush1.msra.mxu0 0.0
        %1233 = vmatprep.subr.mxu0 0.0
        %1234 = vmatpush1.msra.mxu0 0.0
        %1235 = vmatprep.subr.mxu0 0.0
        %1236 = vmatpush1.msra.mxu0 0.0
        %1237 = vmatprep.subr.mxu0 0.0
        %1238 = vmatpush1.msra.mxu0 0.0
        %1239 = vmatprep.subr.mxu0 0.0
        %1240 = vmatpush1.msra.mxu0 0.0
        %1241 = vmatprep.subr.mxu0 0.0
        %1242 = vmatpush1.msra.mxu0 0.0
        %1243 = vmatprep.subr.mxu0 0.0
        %1244 = vmatpush1.msra.mxu0 0.0
        %1245 = vmatprep.subr.mxu0 0.0
        %1246 = vmatpush1.msra.mxu0 0.0
        %1247 = vmatprep.subr.mxu0 0.0
        %1248 = vmatpush1.msra.mxu0 0.0
        %1249 = vmatprep.subr.mxu0 0.0
        %1250 = vmatpush1.msra.mxu0 0.0
        %1251 = vmatprep.subr.mxu0 0.0
        %1252 = vmatpush1.msra.mxu0 0.0
        %1253 = vmatprep.subr.mxu0 0.0
        %1254 = vmatpush1.msra.mxu0 0.0
        %1255 = vmatprep.subr.mxu0 0.0
        %1256 = vmatpush1.msra.mxu0 0.0
        %1257 = vmatprep.subr.mxu0 0.0
        %1258 = vmatpush1.msra.mxu0 0.0
        %1259 = vmatprep.subr.mxu0 0.0
        %1260 = vmatpush1.msra.mxu0 0.0
        %1261 = vmatprep.subr.mxu0 0.0
        %1262 = vmatpush1.msra.mxu0 0.0
        %1263 = vmatprep.subr.mxu0 0.0
        %1264 = vmatpush1.msra.mxu0 0.0
        %1265 = vmatprep.mubr.f32.mxu0 0.0
        %1266 = vmatmul.mubr.f32.gmra.mrb[0].mxu0 %v1196
        %v1267 = vpop.f32.mrb[0].mxu0
        %v1268 = vadd.f32 0.0, %v1267
        %v1269 = vpop.f32.mrb[0].mxu0
        %1270 = vmatprep.mubr.f32.mxu0 0.0
        %1271 = vmatmul.mubr.f32.gmra.mrb[0].mxu0 %v1199
        %v1272 = vpop.f32.mrb[0].mxu0
        %v1273 = vadd.f32 0.0, %v1272
        %v1274 = vpop.f32.mrb[0].mxu0
        %1275 = vdwg.mxu0
        %v1276 = vadd.f32 %v1188, %v1268
        %v1277 = vadd.f32 %v1189, %v1273
        %s1278 = scalar_lea.vmem [#allocation5], 320
        %v1279 = vld [vmem:[%s1278] sm:$0xff]
        %v1280 = vld [vmem:[%s1278 + $0x8] sm:$0xff]
        %v1281 = vld [vmem:[%s1278 + $0x10] sm:$0xff]
        %v1282 = vld [vmem:[%s1278 + $0x18] sm:$0xff]
        %v1284 = vsel %vm356, %v352, 0
        %v1287 = vsel %vm356, %v353, 0
        %1289 = vmatprep.subr.mxu0 0.0
        %1290 = vmatpush1.msra.mxu0 %v1279
        %1291 = vmatprep.subr.mxu0 0.0
        %1292 = vmatpush1.msra.mxu0 %v1280
        %1293 = vmatprep.subr.mxu0 0.0
        %1294 = vmatpush1.msra.mxu0 %v1281
        %1295 = vmatprep.subr.mxu0 0.0
        %1296 = vmatpush1.msra.mxu0 %v1282
        %1297 = vmatprep.subr.mxu0 0.0
        %1298 = vmatpush1.msra.mxu0 0.0
        %1299 = vmatprep.subr.mxu0 0.0
        %1300 = vmatpush1.msra.mxu0 0.0
        %1301 = vmatprep.subr.mxu0 0.0
        %1302 = vmatpush1.msra.mxu0 0.0
        %1303 = vmatprep.subr.mxu0 0.0
        %1304 = vmatpush1.msra.mxu0 0.0
        %1305 = vmatprep.subr.mxu0 0.0
        %1306 = vmatpush1.msra.mxu0 0.0
        %1307 = vmatprep.subr.mxu0 0.0
        %1308 = vmatpush1.msra.mxu0 0.0
        %1309 = vmatprep.subr.mxu0 0.0
        %1310 = vmatpush1.msra.mxu0 0.0
        %1311 = vmatprep.subr.mxu0 0.0
        %1312 = vmatpush1.msra.mxu0 0.0
        %1313 = vmatprep.subr.mxu0 0.0
        %1314 = vmatpush1.msra.mxu0 0.0
        %1315 = vmatprep.subr.mxu0 0.0
        %1316 = vmatpush1.msra.mxu0 0.0
        %1317 = vmatprep.subr.mxu0 0.0
        %1318 = vmatpush1.msra.mxu0 0.0
        %1319 = vmatprep.subr.mxu0 0.0
        %1320 = vmatpush1.msra.mxu0 0.0
        %1321 = vmatprep.subr.mxu0 0.0
        %1322 = vmatpush1.msra.mxu0 0.0
        %1323 = vmatprep.subr.mxu0 0.0
        %1324 = vmatpush1.msra.mxu0 0.0
        %1325 = vmatprep.subr.mxu0 0.0
        %1326 = vmatpush1.msra.mxu0 0.0
        %1327 = vmatprep.subr.mxu0 0.0
        %1328 = vmatpush1.msra.mxu0 0.0
        %1329 = vmatprep.subr.mxu0 0.0
        %1330 = vmatpush1.msra.mxu0 0.0
        %1331 = vmatprep.subr.mxu0 0.0
        %1332 = vmatpush1.msra.mxu0 0.0
        %1333 = vmatprep.subr.mxu0 0.0
        %1334 = vmatpush1.msra.mxu0 0.0
        %1335 = vmatprep.subr.mxu0 0.0
        %1336 = vmatpush1.msra.mxu0 0.0
        %1337 = vmatprep.subr.mxu0 0.0
        %1338 = vmatpush1.msra.mxu0 0.0
        %1339 = vmatprep.subr.mxu0 0.0
        %1340 = vmatpush1.msra.mxu0 0.0
        %1341 = vmatprep.subr.mxu0 0.0
        %1342 = vmatpush1.msra.mxu0 0.0
        %1343 = vmatprep.subr.mxu0 0.0
        %1344 = vmatpush1.msra.mxu0 0.0
        %1345 = vmatprep.subr.mxu0 0.0
        %1346 = vmatpush1.msra.mxu0 0.0
        %1347 = vmatprep.subr.mxu0 0.0
        %1348 = vmatpush1.msra.mxu0 0.0
        %1349 = vmatprep.subr.mxu0 0.0
        %1350 = vmatpush1.msra.mxu0 0.0
        %1351 = vmatprep.subr.mxu0 0.0
        %1352 = vmatpush1.msra.mxu0 0.0
        %1353 = vmatprep.mubr.f32.mxu0 0.0
        %1354 = vmatmul.mubr.f32.gmra.mrb[0].mxu0 %v1284
        %v1355 = vpop.f32.mrb[0].mxu0
        %v1356 = vadd.f32 0.0, %v1355
        %v1357 = vpop.f32.mrb[0].mxu0
        %1358 = vmatprep.mubr.f32.mxu0 0.0
        %1359 = vmatmul.mubr.f32.gmra.mrb[0].mxu0 %v1287
        %v1360 = vpop.f32.mrb[0].mxu0
        %v1361 = vadd.f32 0.0, %v1360
        %v1362 = vpop.f32.mrb[0].mxu0
        %1363 = vdwg.mxu0
        %v1364 = vadd.f32 %v1276, %v1356
        %v1365 = vadd.f32 %v1277, %v1361
        %s1366 = scalar_lea.vmem [#allocation5], 352
        %v1367 = vld [vmem:[%s1366] sm:$0xff]
        %v1368 = vld [vmem:[%s1366 + $0x8] sm:$0xff]
        %v1369 = vld [vmem:[%s1366 + $0x10] sm:$0xff]
        %v1370 = vld [vmem:[%s1366 + $0x18] sm:$0xff]
        %v1372 = vsel %vm356, %v354, 0
        %v1375 = vsel %vm356, %v355, 0
        %1377 = vmatprep.subr.mxu0 0.0
        %1378 = vmatpush1.msra.mxu0 %v1367
        %1379 = vmatprep.subr.mxu0 0.0
        %1380 = vmatpush1.msra.mxu0 %v1368
        %1381 = vmatprep.subr.mxu0 0.0
        %1382 = vmatpush1.msra.mxu0 %v1369
        %1383 = vmatprep.subr.mxu0 0.0
        %1384 = vmatpush1.msra.mxu0 %v1370
        %1385 = vmatprep.subr.mxu0 0.0
        %1386 = vmatpush1.msra.mxu0 0.0
        %1387 = vmatprep.subr.mxu0 0.0
        %1388 = vmatpush1.msra.mxu0 0.0
        %1389 = vmatprep.subr.mxu0 0.0
        %1390 = vmatpush1.msra.mxu0 0.0
        %1391 = vmatprep.subr.mxu0 0.0
        %1392 = vmatpush1.msra.mxu0 0.0
        %1393 = vmatprep.subr.mxu0 0.0
        %1394 = vmatpush1.msra.mxu0 0.0
        %1395 = vmatprep.subr.mxu0 0.0
        %1396 = vmatpush1.msra.mxu0 0.0
        %1397 = vmatprep.subr.mxu0 0.0
        %1398 = vmatpush1.msra.mxu0 0.0
        %1399 = vmatprep.subr.mxu0 0.0
        %1400 = vmatpush1.msra.mxu0 0.0
        %1401 = vmatprep.subr.mxu0 0.0
        %1402 = vmatpush1.msra.mxu0 0.0
        %1403 = vmatprep.subr.mxu0 0.0
        %1404 = vmatpush1.msra.mxu0 0.0
        %1405 = vmatprep.subr.mxu0 0.0
        %1406 = vmatpush1.msra.mxu0 0.0
        %1407 = vmatprep.subr.mxu0 0.0
        %1408 = vmatpush1.msra.mxu0 0.0
        %1409 = vmatprep.subr.mxu0 0.0
        %1410 = vmatpush1.msra.mxu0 0.0
        %1411 = vmatprep.subr.mxu0 0.0
        %1412 = vmatpush1.msra.mxu0 0.0
        %1413 = vmatprep.subr.mxu0 0.0
        %1414 = vmatpush1.msra.mxu0 0.0
        %1415 = vmatprep.subr.mxu0 0.0
        %1416 = vmatpush1.msra.mxu0 0.0
        %1417 = vmatprep.subr.mxu0 0.0
        %1418 = vmatpush1.msra.mxu0 0.0
        %1419 = vmatprep.subr.mxu0 0.0
        %1420 = vmatpush1.msra.mxu0 0.0
        %1421 = vmatprep.subr.mxu0 0.0
        %1422 = vmatpush1.msra.mxu0 0.0
        %1423 = vmatprep.subr.mxu0 0.0
        %1424 = vmatpush1.msra.mxu0 0.0
        %1425 = vmatprep.subr.mxu0 0.0
        %1426 = vmatpush1.msra.mxu0 0.0
        %1427 = vmatprep.subr.mxu0 0.0
        %1428 = vmatpush1.msra.mxu0 0.0
        %1429 = vmatprep.subr.mxu0 0.0
        %1430 = vmatpush1.msra.mxu0 0.0
        %1431 = vmatprep.subr.mxu0 0.0
        %1432 = vmatpush1.msra.mxu0 0.0
        %1433 = vmatprep.subr.mxu0 0.0
        %1434 = vmatpush1.msra.mxu0 0.0
        %1435 = vmatprep.subr.mxu0 0.0
        %1436 = vmatpush1.msra.mxu0 0.0
        %1437 = vmatprep.subr.mxu0 0.0
        %1438 = vmatpush1.msra.mxu0 0.0
        %1439 = vmatprep.subr.mxu0 0.0
        %1440 = vmatpush1.msra.mxu0 0.0
        %1441 = vmatprep.mubr.f32.mxu0 0.0
        %1442 = vmatmul.mubr.f32.gmra.mrb[0].mxu0 %v1372
        %v1443 = vpop.f32.mrb[0].mxu0
        %v1444 = vadd.f32 0.0, %v1443
        %v1445 = vpop.f32.mrb[0].mxu0
        %1446 = vmatprep.mubr.f32.mxu0 0.0
        %1447 = vmatmul.mubr.f32.gmra.mrb[0].mxu0 %v1375
        %v1448 = vpop.f32.mrb[0].mxu0
        %v1449 = vadd.f32 0.0, %v1448
        %v1450 = vpop.f32.mrb[0].mxu0
        %1451 = vdwg.mxu0
        %v1452 = vadd.f32 %v1364, %v1444
        %v1453 = vadd.f32 %v1365, %v1449
        %v1454 = vld [vmem:[%s2] sm:$0x1]
        %v1456 = vlaneseq
        %v1457 = vshrl.u32 %v1456, 7
        %v1458 = vsub.s32 0, %v1457
        %v1459 = vrot.slane %v1454, %v1458
        %v1461 = vadd.f32 %v1452, %v1459
        %v1462 = vadd.f32 %v1453, %v1459
        %v1463 = vmax.f32 %v1461, 0.0
        %v1464 = vmax.f32 %v1462, 0.0
        %v1465 = vld [vmem:[%s3] sm:$0xff]
        %v1466 = vld [vmem:[%s3 + $0x8] sm:$0xff]
        %v1467 = vld [vmem:[%s3 + $0x10] sm:$0xff]
        %v1468 = vld [vmem:[%s3 + $0x18] sm:$0xff]
        %v1469 = vld [vmem:[%s3 + $0x20] sm:$0xff]
        %v1470 = vld [vmem:[%s3 + $0x28] sm:$0xff]
        %v1471 = vld [vmem:[%s3 + $0x30] sm:$0xff]
        %v1472 = vld [vmem:[%s3 + $0x38] sm:$0xff]
        %v1473 = vld [vmem:[%s4] sm:$0x1]
        %v1475 = vlaneseq
        %v1476 = vshrl.u32 %v1475, 7
        %v1477 = vsub.s32 0, %v1476
        %v1478 = vrot.slane %v1473, %v1477
        %vm1480 = vcmask 523264
        %v1482 = vsel %vm1480, %v1463, 0
        %v1485 = vsel %vm1480, %v1464, 0
        %1487 = vmatprep.subr.mxu0 0.0
        %1488 = vmatpush1.msra.mxu0 %v1465
        %1489 = vmatprep.subr.mxu0 0.0
        %1490 = vmatpush1.msra.mxu0 %v1466
        %1491 = vmatprep.subr.mxu0 0.0
        %1492 = vmatpush1.msra.mxu0 %v1467
        %1493 = vmatprep.subr.mxu0 0.0
        %1494 = vmatpush1.msra.mxu0 %v1468
        %1495 = vmatprep.subr.mxu0 0.0
        %1496 = vmatpush1.msra.mxu0 %v1469
        %1497 = vmatprep.subr.mxu0 0.0
        %1498 = vmatpush1.msra.mxu0 %v1470
        %1499 = vmatprep.subr.mxu0 0.0
        %1500 = vmatpush1.msra.mxu0 %v1471
        %1501 = vmatprep.subr.mxu0 0.0
        %1502 = vmatpush1.msra.mxu0 %v1472
        %1503 = vmatprep.subr.mxu0 0.0
        %1504 = vmatpush1.msra.mxu0 0.0
        %1505 = vmatprep.subr.mxu0 0.0
        %1506 = vmatpush1.msra.mxu0 0.0
        %1507 = vmatprep.subr.mxu0 0.0
        %1508 = vmatpush1.msra.mxu0 0.0
        %1509 = vmatprep.subr.mxu0 0.0
        %1510 = vmatpush1.msra.mxu0 0.0
        %1511 = vmatprep.subr.mxu0 0.0
        %1512 = vmatpush1.msra.mxu0 0.0
        %1513 = vmatprep.subr.mxu0 0.0
        %1514 = vmatpush1.msra.mxu0 0.0
        %1515 = vmatprep.subr.mxu0 0.0
        %1516 = vmatpush1.msra.mxu0 0.0
        %1517 = vmatprep.subr.mxu0 0.0
        %1518 = vmatpush1.msra.mxu0 0.0
        %1519 = vmatprep.subr.mxu0 0.0
        %1520 = vmatpush1.msra.mxu0 0.0
        %1521 = vmatprep.subr.mxu0 0.0
        %1522 = vmatpush1.msra.mxu0 0.0
        %1523 = vmatprep.subr.mxu0 0.0
        %1524 = vmatpush1.msra.mxu0 0.0
        %1525 = vmatprep.subr.mxu0 0.0
        %1526 = vmatpush1.msra.mxu0 0.0
        %1527 = vmatprep.subr.mxu0 0.0
        %1528 = vmatpush1.msra.mxu0 0.0
        %1529 = vmatprep.subr.mxu0 0.0
        %1530 = vmatpush1.msra.mxu0 0.0
        %1531 = vmatprep.subr.mxu0 0.0
        %1532 = vmatpush1.msra.mxu0 0.0
        %1533 = vmatprep.subr.mxu0 0.0
        %1534 = vmatpush1.msra.mxu0 0.0
        %1535 = vmatprep.subr.mxu0 0.0
        %1536 = vmatpush1.msra.mxu0 0.0
        %1537 = vmatprep.subr.mxu0 0.0
        %1538 = vmatpush1.msra.mxu0 0.0
        %1539 = vmatprep.subr.mxu0 0.0
        %1540 = vmatpush1.msra.mxu0 0.0
        %1541 = vmatprep.subr.mxu0 0.0
        %1542 = vmatpush1.msra.mxu0 0.0
        %1543 = vmatprep.subr.mxu0 0.0
        %1544 = vmatpush1.msra.mxu0 0.0
        %1545 = vmatprep.subr.mxu0 0.0
        %1546 = vmatpush1.msra.mxu0 0.0
        %1547 = vmatprep.subr.mxu0 0.0
        %1548 = vmatpush1.msra.mxu0 0.0
        %1549 = vmatprep.subr.mxu0 0.0
        %1550 = vmatpush1.msra.mxu0 0.0
        %1551 = vmatprep.mubr.f32.mxu0 0.0
        %1552 = vmatmul.mubr.f32.gmra.mrb[0].mxu0 %v1482
        %v1553 = vpop.f32.mrb[0].mxu0
        %v1554 = vadd.f32 %v1478, %v1553
        %v1555 = vpop.f32.mrb[0].mxu0
        %1556 = vmatprep.mubr.f32.mxu0 0.0
        %1557 = vmatmul.mubr.f32.gmra.mrb[0].mxu0 %v1485
        %v1558 = vpop.f32.mrb[0].mxu0
        %v1559 = vadd.f32 %v1478, %v1558
        %v1560 = vpop.f32.mrb[0].mxu0
        %1561 = vdwg.mxu0
        %v1562 = vadd.f32 %v379, %v1554
        %v1563 = vadd.f32 %v402, %v1559
        %v1564 = vsel %vm356, %v1562, 0.0
        %1565 = vadd.xlane.f32.xlu0 %v1564
        %v1566 = vpop.xlane.xlu0 %1565
        %v1567 = vsel %vm356, %v1563, 0.0
        %1568 = vadd.xlane.f32.xlu0 %v1567
        %v1569 = vpop.xlane.xlu0 %1568
        %v1570 = vrcp.pop 32.0
        %v1571 = vmul.f32 %v1566, %v1570
        %v1572 = vmul.f32 %v1569, %v1570
        %v1573 = vsub.f32 %v1562, %v1571
        %v1574 = vsub.f32 %v1563, %v1572
        %v1575 = vmul.f32 %v1573, %v1573
        %v1576 = vmul.f32 %v1574, %v1574
        %v1577 = vsel %vm356, %v1575, 0.0
        %1578 = vadd.xlane.f32.xlu0 %v1577
        %v1579 = vpop.xlane.xlu0 %1578
        %v1580 = vsel %vm356, %v1576, 0.0
        %1581 = vadd.xlane.f32.xlu0 %v1580
        %v1582 = vpop.xlane.xlu0 %1581
        %v1583 = vmul.f32 %v1579, %v1570
        %v1584 = vmul.f32 %v1582, %v1570
        %v1585 = vadd.f32 %v1583, 1e-05
        %v1586 = vadd.f32 %v1584, 1e-05
        %v1587 = vrsqrt.pop %v1585
        %v1588 = vrsqrt.pop %v1586
        %v1589 = vmul.f32 %v1573, %v1587
        %v1590 = vmul.f32 %v1574, %v1588
        %v1591 = vld [vmem:[%s5] sm:$0x1]
        %v1593 = vlaneseq
        %v1594 = vshrl.u32 %v1593, 7
        %v1595 = vsub.s32 0, %v1594
        %v1596 = vrot.slane %v1591, %v1595
        %v1598 = vmul.f32 %v1589, %v1596
        %v1599 = vmul.f32 %v1590, %v1596
        %v1600 = vld [vmem:[%s6] sm:$0x1]
        %v1602 = vlaneseq
        %v1603 = vshrl.u32 %v1602, 7
        %v1604 = vsub.s32 0, %v1603
        %v1605 = vrot.slane %v1600, %v1604
        %v1607 = vadd.f32 %v1598, %v1605
        %v1608 = vadd.f32 %v1599, %v1605
        %1609 = vst.msk [vmem:[%s329] sm:$0xff] %vm356, %v1607
        %1610 = vst.msk [vmem:[%s329 + $0x8] sm:$0xff] %vm356, %v1608
        %s1611 = sand.u32 %s201, 1
        %s1612 = scalar_lea.sflag [#allocation4], %s1611
        %s1613 = sand.u32 %s201, 1
        %s1614 = smul.addr %s1613, 16
        %s1615 = scalar_lea.vmem [#allocation7], %s1614
        // Predicated region
        $region57: #{tpu_custom_call.1} parent=47 // pred_check
          %p1616 = pneg %p211
        $region58: #{tpu_custom_call.1} parent=47 // pred_check_branch
          %1618 = sbr.rel (%p1616) target = $region60
        $region59: #{tpu_custom_call.1} parent=47 // pred_region
          %s1619 = smul.u32 2, %s30
          %s1621 = ssub.s32 256, 256
          %1622 = vsyncadd %s1612, %s1621
          %s1623 = smul.addr %s29, 2
          %s1624 = sadd.s32 %s1619, %s1623
          %s1625 = smul.addr %s1624, 128
          %s1626 = scalar_lea.hbm %s7, %s1625
          %s1627 = sshll.u32 %s1615, 4
          %s1628 = int_to_ptr.vmem [resolvable:$true] %s1627
          %1633 = dma.vmem_to_hbm [thread:$0]  %s1628, 256, %s1626, %s1612, 128, 128, 8
        $region60: #{tpu_custom_call.1} parent=47 // pred_fallthru
          _
      $region48: #{tpu_custom_call.1} parent=5 // pred_fallthru
        _
      %p1634 = scmp.le.s32.totalorder 2, %s20
      // Predicated region
      $region61: #{tpu_custom_call.1} parent=5 // pred_check
        %p1635 = pneg %p1634
      $region62: #{tpu_custom_call.1} parent=5 // pred_check_branch
        %1637 = sbr.rel (%p1635) target = $region64
      $region63: #{tpu_custom_call.1} parent=5 // pred_region
        %s1638 = ssub.s32 %s20, 2
        // Predicated region
        $region65: #{tpu_custom_call.1} parent=63 // pred_check
          %p1639 = pneg %p217
        $region66: #{tpu_custom_call.1} parent=63 // pred_check_branch
          %1641 = sbr.rel (%p1639) target = $region68
        $region67: #{tpu_custom_call.1} parent=63 // pred_region
          %s1642 = sand.u32 %s202, 1
          %s1643 = scalar_lea.sflag [#allocation4], %s1642
          %s1644 = sand.u32 %s202, 1
          %s1645 = smul.addr %s1644, 16
          %s1646 = scalar_lea.vmem [#allocation7], %s1645
          %1647 = dma.done %s1643, 256
        $region68: #{tpu_custom_call.1} parent=63 // pred_fallthru
          _
      $region64: #{tpu_custom_call.1} parent=5 // pred_fallthru
        _
    $region6: #{tpu_custom_call.1} parent=1 // loop_footer
      %s24 = sadd.s32 1, %s20
    $region7: #{tpu_custom_call.1} parent=1 // loop_footer_branch
      %19 = sbr.rel target = $region3
    $region8: #{tpu_custom_call.1} parent=1 // loop_exit
      _
    %1648 = vsyncpa [#allocation3], 1
    %s1649 = scalar_lea.sflag [#allocation3], 1
    %1650 = vsyncpa %s1649, 1
    %1651 = vsyncpa [#allocation6], 1
    %1652 = vsyncpa [#allocation4], 1
    %s1653 = scalar_lea.sflag [#allocation4], 1
    %1654 = vsyncpa %s1653, 1

</llo_original>
